<compile_context>
chip_gen: v6e
topology: v6e:2x2x1
jax: 0.10.0
libtpu: 0.0.40
codegen_flags: <defaults>
</compile_context>

<pallas_src>
import jax
import jax.numpy as jnp
from jax import lax
from jax.experimental import pallas as pl
from jax.experimental.pallas import tpu as pltpu


def _round_up(v, m):
    return (v + m - 1) // m * m


def _make_kernel(C, N, N_pad, TQ, dq_pad, c_pad, dkv, n_inner):
    def kernel(x_ref, wq_ref, bq_ref, wkv_ref, bkv_ref, gamma_ref,
               out_ref, attn_ref, kv_ref):
        o = pl.program_id(1)
        t = pl.program_id(2)

        # Hoisted K/V projection (+ bias): once per (batch, outer-split), not per tile.
        @pl.when(t == 0)
        def _():
            kv_ref[...] = jnp.dot(wkv_ref[...], x_ref[...],
                                  preferred_element_type=jnp.float32) + bkv_ref[...]

        col = pl.multiple_of((o * n_inner + t) * TQ, TQ)
        x_tile = x_ref[:, pl.ds(col, TQ)]                              # (C, TQ)

        # Q projection only for this tile's query columns.
        q_t = jnp.dot(wq_ref[...], x_tile,
                      preferred_element_type=jnp.float32) + bq_ref[...]  # (dq_pad, TQ)
        k_t = kv_ref[0:dq_pad, :]                                      # (dq_pad, N_pad)
        v_t = kv_ref[dq_pad:dq_pad + c_pad, :]                         # (c_pad,  N_pad)

        # energy[i, j] = <q_i, k_j>  -- contract channel axis directly (no .T).
        energy = lax.dot_general(q_t, k_t, (((0,), (0,)), ((), ())),
                                 preferred_element_type=jnp.float32)   # (TQ, N_pad)
        if N_pad != N:
            # Mask padded key columns so they contribute nothing to the softmax.
            key_valid = lax.broadcasted_iota(jnp.int32, (TQ, N_pad), 1) < N
            energy = jnp.where(key_valid, energy, -jnp.inf)

        # Numerically stable softmax; minimal elementwise passes over the slab.
        m = jnp.max(energy, axis=-1, keepdims=True)
        e = jnp.exp(energy - m)
        # Row-sum on the (otherwise idle) MXU instead of another XLU/VPU pass.
        denom = jnp.dot(e, jnp.ones((N_pad, 1), jnp.float32),
                        preferred_element_type=jnp.float32)            # (TQ, 1)
        r = pl.reciprocal(denom, approx=True)
        r = r * (2.0 - denom * r)                                      # one Newton step
        attn = e * r                                                   # (TQ, N_pad)
        attn_ref[...] = attn

        # out[c, i] = sum_j v[c, j] * attn[i, j]
        #   (== torch.bmm(proj_value, attention.permute(0, 2, 1)))
        o_t = lax.dot_general(v_t, attn, (((1,), (1,)), ((), ())),
                              preferred_element_type=jnp.float32)      # (c_pad, TQ)
        out_ref[...] = gamma_ref[0] * o_t[0:C, :] + x_tile * 0.001

    return kernel


def self_attn_res_pallas(x_nchw, wq, bq, wk, bk, wv, bv, gamma):
    """x_nchw: (B, C, W, H) float32. Returns (out (B, C, W, H), attention (B, N, N))."""
    B, C, W, H = x_nchw.shape
    N = W * H
    Dq = wq.shape[0]
    N_pad = _round_up(N, 128)         # lane-align the spatial axis (no masked stores)

    x_cn = x_nchw.reshape(B, C, N).astype(jnp.float32)
    if N_pad != N:
        x_cn = jnp.pad(x_cn, ((0, 0), (0, 0), (0, N_pad - N)))

    dq_pad = _round_up(Dq, 8)
    c_pad = _round_up(C, 8)
    dkv = dq_pad + c_pad

    def pad_rows(w_mat, b_vec, rows):
        w_mat = w_mat.astype(jnp.float32)
        b_vec = b_vec.astype(jnp.float32)
        return (jnp.pad(w_mat, ((0, rows - w_mat.shape[0]), (0, 0))),
                jnp.pad(b_vec, ((0, rows - b_vec.shape[0]),)))

    wq_p, bq_p = pad_rows(wq, bq, dq_pad)
    wk_p, bk_p = pad_rows(wk, bk, dq_pad)
    wv_p, bv_p = pad_rows(wv, bv, c_pad)

    # Fuse K and V projections (both computed once per batch over the full row).
    wkv = jnp.concatenate([wk_p, wv_p], axis=0)                   # (dkv, C)
    bkv = jnp.concatenate([bk_p, bv_p], axis=0).reshape(dkv, 1)   # (dkv, 1)
    bq_c = bq_p.reshape(dq_pad, 1)
    gamma_s = gamma.reshape(1).astype(jnp.float32)                # SMEM scalar

    # Generation-aware VMEM budget: ~5/8 of physical VMEM, capped at 96 MiB
    # (≈40 MiB on v7x, ≈80 MiB on v5e/v6e).
    try:
        vmem_cap = int(pltpu.get_tpu_info().vmem_capacity_bytes)
    except Exception:
        vmem_cap = 64 * 1024 * 1024
    budget = min((vmem_cap * 5) // 8, 96 * 1024 * 1024)

    def est(tq):
        return 4 * (2 * C * N_pad            # x block (double-buffered)
                    + 2 * C * tq             # out block
                    + 2 * tq * N_pad         # attention block
                    + dkv * N_pad            # KV scratch
                    + 4 * tq * N_pad         # energy / exp / attn temporaries
                    + (dq_pad + dkv) * (C + 2))

    # Largest lane-aligned TQ (multiple of 128, divides N_pad, <=1024) within budget.
    TQ = 128
    tq = 128
    while tq <= min(N_pad, 1024):
        if N_pad % tq == 0 and est(tq) <= budget:
            TQ = tq
        tq += 128
    n_row_tiles = N_pad // TQ

    # Megacore: if B == 1, split the row-tile axis so both TensorCores get work.
    n_outer = 2 if (B == 1 and n_row_tiles >= 2 and n_row_tiles % 2 == 0) else 1
    n_inner = n_row_tiles // n_outer

    vmem_limit = int(min(max(est(TQ) + (4 << 20), budget), vmem_cap))

    kernel = _make_kernel(C, N, N_pad, TQ, dq_pad, c_pad, dkv, n_inner)

    out_cn, attn = pl.pallas_call(
        kernel,
        out_shape=(
            jax.ShapeDtypeStruct((B, C, N_pad), jnp.float32),
            jax.ShapeDtypeStruct((B, N_pad, N_pad), jnp.float32),
        ),
        grid_spec=pltpu.PrefetchScalarGridSpec(
            num_scalar_prefetch=0,
            grid=(B, n_outer, n_inner),
            in_specs=[
                pl.BlockSpec((None, C, N_pad), lambda b, o, t: (b, 0, 0)),  # x (per batch)
                pl.BlockSpec((dq_pad, C), lambda b, o, t: (0, 0)),          # Wq
                pl.BlockSpec((dq_pad, 1), lambda b, o, t: (0, 0)),          # bq
                pl.BlockSpec((dkv, C), lambda b, o, t: (0, 0)),             # [Wk; Wv]
                pl.BlockSpec((dkv, 1), lambda b, o, t: (0, 0)),             # [bk; bv]
                pl.BlockSpec(memory_space=pltpu.MemorySpace.SMEM),          # gamma
            ],
            out_specs=[
                pl.BlockSpec((None, C, TQ), lambda b, o, t: (b, 0, o * n_inner + t)),
                pl.BlockSpec((None, TQ, N_pad), lambda b, o, t: (b, o * n_inner + t, 0)),
            ],
            scratch_shapes=[pltpu.VMEM((dkv, N_pad), jnp.float32)],         # hoisted KV
        ),
        compiler_params=pltpu.CompilerParams(
            dimension_semantics=("parallel", "parallel", "arbitrary"),
            vmem_limit_bytes=vmem_limit,
        ),
    )(x_cn, wq_p, bq_c, wkv, bkv, gamma_s)

    out = out_cn[:, :, :N].reshape(B, C, W, H)
    attention = attn[:, :N, :N]
    return out, attention


def _reference(x_nchw, wq, bq, wk, bk, wv, bv, gamma):
    """Pure-JAX reference mirroring the torch forward exactly."""
    B, C, W, H = x_nchw.shape
    N = W * H
    x_flat = x_nchw.reshape(B, C, N)
    q = jnp.einsum('dc,bcn->bdn', wq, x_flat) + bq[None, :, None]
    k = jnp.einsum('dc,bcn->bdn', wk, x_flat) + bk[None, :, None]
    v = jnp.einsum('dc,bcn->bdn', wv, x_flat) + bv[None, :, None]
    energy = jnp.einsum('bnd,bdm->bnm', jnp.transpose(q, (0, 2, 1)), k)
    attn = jax.nn.softmax(energy, axis=-1)
    out = jnp.einsum('bcn,bmn->bcm', v, attn).reshape(B, C, W, H)
    out = gamma * out + x_nchw * 0.001
    return out, attn


def _run_case(key, B, C, W, H, Dq):
    kx, k1, k2, k3, k4, k5, k6, k7 = jax.random.split(key, 8)
    x = jax.random.normal(kx, (B, C, W, H), dtype=jnp.float32)
    wq = jax.random.normal(k1, (Dq, C), dtype=jnp.float32) * 0.1
    bq = jax.random.normal(k2, (Dq,), dtype=jnp.float32) * 0.1
    wk = jax.random.normal(k3, (Dq, C), dtype=jnp.float32) * 0.1
    bk = jax.random.normal(k4, (Dq,), dtype=jnp.float32) * 0.1
    wv = jax.random.normal(k5, (C, C), dtype=jnp.float32) * 0.1
    bv = jax.random.normal(k6, (C,), dtype=jnp.float32) * 0.1
    # gamma is nn.Parameter(torch.zeros(1)) in the module; use a non-zero value so
    # the attention branch of the residual mix is actually exercised.
    gamma = jax.random.normal(k7, (1,), dtype=jnp.float32) * 0.5

    out, attn = self_attn_res_pallas(x, wq, bq, wk, bk, wv, bv, gamma)
    out = jax.block_until_ready(out)
    attn = jax.block_until_ready(attn)

    out_ref, attn_ref = _reference(x, wq, bq, wk, bk, wv, bv, gamma)
    N = W * H
    assert out.shape == (B, C, W, H) and attn.shape == (B, N, N)
    assert jnp.allclose(out, out_ref, atol=1e-4, rtol=1e-3)
    assert jnp.allclose(attn, attn_ref, atol=1e-4, rtol=1e-3)


if __name__ == "__main__":
    key = jax.random.PRNGKey(0)
    k0, k1, k2 = jax.random.split(key, 3)

    # lane-aligned spatial size (N = 256)
    _run_case(k0, B=2, C=4, W=16, H=16, Dq=8)
    # non-aligned spatial size (N = 100 -> padded to 128, masked softmax path)
    _run_case(k1, B=1, C=4, W=10, H=10, Dq=8)
    # B == 1 with multiple row tiles (exercises the megacore outer split path)
    _run_case(k2, B=1, C=4, W=32, H=64, Dq=8)

    print("KERNEL_OK")
</pallas_src>

<mosaic_0001>
module attributes {stable_mosaic.version = 11 : i64} {
  func.func @kernel(%arg0: i32, %arg1: i32, %arg2: i32, %arg3: memref<1x4x256xf32, #tpu.memory_space<vmem>>, %arg4: memref<8x4xf32, #tpu.memory_space<vmem>>, %arg5: memref<8x1xf32, #tpu.memory_space<vmem>>, %arg6: memref<16x4xf32, #tpu.memory_space<vmem>>, %arg7: memref<16x1xf32, #tpu.memory_space<vmem>>, %arg8: memref<1xf32, #tpu.memory_space<smem>>, %arg9: memref<1x4x256xf32, #tpu.memory_space<vmem>>, %arg10: memref<1x256x256xf32, #tpu.memory_space<vmem>>, %arg11: memref<16x256xf32, #tpu.memory_space<vmem>>) attributes {dimension_semantics = [#tpu.dimension_semantics<parallel>, #tpu.dimension_semantics<parallel>, #tpu.dimension_semantics<arbitrary>], iteration_bounds = array<i64: 2, 1, 1>, scalar_prefetch = 0 : i64, scratch_operands = 1 : i64, tpu.core_type = #tpu.core_type<tc>, window_params = [{transform_indices = @transform_0, window_bounds = array<i64: 1, 4, 256>}, {pipeline_mode = #tpu.pipeline_mode<synchronous>, transform_indices = @transform_1, window_bounds = array<i64: 8, 4>}, {pipeline_mode = #tpu.pipeline_mode<synchronous>, transform_indices = @transform_2, window_bounds = array<i64: 8, 1>}, {pipeline_mode = #tpu.pipeline_mode<synchronous>, transform_indices = @transform_3, window_bounds = array<i64: 16, 4>}, {pipeline_mode = #tpu.pipeline_mode<synchronous>, transform_indices = @transform_4, window_bounds = array<i64: 16, 1>}, {transform_indices = @transform_5, window_bounds = array<i64: 1>}, {transform_indices = @transform_6, window_bounds = array<i64: 1, 4, 256>}, {transform_indices = @transform_7, window_bounds = array<i64: 1, 256, 256>}]} {
    %c0_i32 = arith.constant 0 : i32
    %0 = arith.cmpi eq, %arg2, %c0_i32 : i32
    %1 = arith.extui %0 : i1 to i32
    %c0_i32_0 = arith.constant 0 : i32
    %2 = arith.cmpi ne, %1, %c0_i32_0 : i32
    scf.if %2 {
      %c0_23 = arith.constant 0 : index
      %c0_24 = arith.constant 0 : index
      %46 = vector.load %arg6[%c0_23, %c0_24] : memref<16x4xf32, #tpu.memory_space<vmem>>, vector<16x4xf32>
      %c0_25 = arith.constant 0 : index
      %c0_26 = arith.constant 0 : index
      %c0_27 = arith.constant 0 : index
      %47 = vector.load %arg3[%c0_25, %c0_26, %c0_27] : memref<1x4x256xf32, #tpu.memory_space<vmem>>, vector<1x4x256xf32>
      %48 = vector.shape_cast %47 : vector<1x4x256xf32> to vector<4x256xf32>
      %cst_28 = arith.constant dense<0.000000e+00> : vector<16x256xf32>
      %49 = tpu.matmul %46, %48, %cst_28 {dimension_numbers = #tpu.dot_dimension_numbers<[1], [0], [0], [1], [0, 0, 1, 1], [], []>} : vector<16x4xf32>, vector<4x256xf32>, vector<16x256xf32> -> vector<16x256xf32>
      %c0_29 = arith.constant 0 : index
      %c0_30 = arith.constant 0 : index
      %50 = vector.load %arg7[%c0_29, %c0_30] : memref<16x1xf32, #tpu.memory_space<vmem>>, vector<16x1xf32>
      %51 = vector.broadcast %50 : vector<16x1xf32> to vector<16x256xf32>
      %52 = arith.addf %49, %51 : vector<16x256xf32>
      %c0_31 = arith.constant 0 : index
      %c0_32 = arith.constant 0 : index
      %53 = vector.load %arg11[%c0_31, %c0_32] : memref<16x256xf32, #tpu.memory_space<vmem>>, vector<16x256xf32>
      tpu.vector_store %arg11[%c0_31, %c0_32], %52 {strides = array<i32>} : memref<16x256xf32, #tpu.memory_space<vmem>>, vector<16x256xf32>,
    } else {
    }
    %c1_i32 = arith.constant 1 : i32
    %3 = arith.muli %arg1, %c1_i32 : i32
    %4 = arith.addi %3, %arg2 : i32
    %c256_i32 = arith.constant 256 : i32
    %5 = arith.muli %4, %c256_i32 : i32
    %6 = tpu.assume_multiple %5, 256 : i32
    %c0 = arith.constant 0 : index
    %c0_1 = arith.constant 0 : index
    %7 = arith.index_cast %6 : i32 to index
    %8 = vector.load %arg3[%c0, %c0_1, %7] : memref<1x4x256xf32, #tpu.memory_space<vmem>>, vector<1x4x256xf32>
    %9 = vector.shape_cast %8 : vector<1x4x256xf32> to vector<4x256xf32>
    %c0_2 = arith.constant 0 : index
    %c0_3 = arith.constant 0 : index
    %10 = vector.load %arg4[%c0_2, %c0_3] : memref<8x4xf32, #tpu.memory_space<vmem>>, vector<8x4xf32>
    %cst = arith.constant dense<0.000000e+00> : vector<8x256xf32>
    %11 = tpu.matmul %10, %9, %cst {dimension_numbers = #tpu.dot_dimension_numbers<[1], [0], [0], [1], [0, 0, 1, 1], [], []>} : vector<8x4xf32>, vector<4x256xf32>, vector<8x256xf32> -> vector<8x256xf32>
    %c0_4 = arith.constant 0 : index
    %c0_5 = arith.constant 0 : index
    %12 = vector.load %arg5[%c0_4, %c0_5] : memref<8x1xf32, #tpu.memory_space<vmem>>, vector<8x1xf32>
    %13 = vector.broadcast %12 : vector<8x1xf32> to vector<8x256xf32>
    %14 = arith.addf %11, %13 : vector<8x256xf32>
    %c0_6 = arith.constant 0 : index
    %c0_7 = arith.constant 0 : index
    %15 = vector.load %arg11[%c0_6, %c0_7] : memref<16x256xf32, #tpu.memory_space<vmem>>, vector<8x256xf32>
    %c8 = arith.constant 8 : index
    %c0_8 = arith.constant 0 : index
    %16 = vector.load %arg11[%c8, %c0_8] : memref<16x256xf32, #tpu.memory_space<vmem>>, vector<8x256xf32>
    %cst_9 = arith.constant dense<0.000000e+00> : vector<256x256xf32>
    %17 = tpu.matmul %14, %15, %cst_9 {dimension_numbers = #tpu.dot_dimension_numbers<[0], [0], [1], [1], [0, 1, 1, 1], [], []>} : vector<8x256xf32>, vector<8x256xf32>, vector<256x256xf32> -> vector<256x256xf32>
    %cst_10 = arith.constant dense<0xFF800000> : vector<256xf32>
    %18 = vector.multi_reduction <maximumf>, %17, %cst_10 [1] : vector<256x256xf32> to vector<256xf32>
    %19 = vector.shape_cast %18 : vector<256xf32> to vector<256x1xf32>
    %20 = vector.broadcast %19 : vector<256x1xf32> to vector<256x256xf32>
    %21 = arith.subf %17, %20 : vector<256x256xf32>
    %22 = math.exp %21 : vector<256x256xf32>
    %cst_11 = arith.constant 1.000000e+00 : f32
    %23 = vector.broadcast %cst_11 : f32 to vector<256x1xf32>
    %cst_12 = arith.constant dense<0.000000e+00> : vector<256x1xf32>
    %24 = tpu.matmul %22, %23, %cst_12 {dimension_numbers = #tpu.dot_dimension_numbers<[1], [0], [0], [1], [0, 0, 1, 1], [], []>} : vector<256x256xf32>, vector<256x1xf32>, vector<256x1xf32> -> vector<256x1xf32>
    %25 = tpu.reciprocal %24 {approx = true} : vector<256x1xf32> -> vector<256x1xf32>
    %26 = arith.mulf %24, %25 : vector<256x1xf32>
    %cst_13 = arith.constant 2.000000e+00 : f32
    %27 = vector.broadcast %cst_13 : f32 to vector<256x1xf32>
    %28 = arith.subf %27, %26 : vector<256x1xf32>
    %29 = arith.mulf %25, %28 : vector<256x1xf32>
    %30 = vector.broadcast %29 : vector<256x1xf32> to vector<256x256xf32>
    %31 = arith.mulf %22, %30 : vector<256x256xf32>
    %c0_14 = arith.constant 0 : index
    %c0_15 = arith.constant 0 : index
    %c0_16 = arith.constant 0 : index
    %32 = vector.load %arg10[%c0_14, %c0_15, %c0_16] : memref<1x256x256xf32, #tpu.memory_space<vmem>>, vector<1x256x256xf32>
    %33 = vector.shape_cast %32 : vector<1x256x256xf32> to vector<256x256xf32>
    %34 = vector.shape_cast %31 : vector<256x256xf32> to vector<1x256x256xf32>
    tpu.vector_store %arg10[%c0_14, %c0_15, %c0_16], %34 {strides = array<i32>} : memref<1x256x256xf32, #tpu.memory_space<vmem>>, vector<1x256x256xf32>,
    %cst_17 = arith.constant dense<0.000000e+00> : vector<8x256xf32>
    %35 = tpu.matmul %16, %31, %cst_17 {dimension_numbers = #tpu.dot_dimension_numbers<[1], [1], [0], [0], [0, 0, 1, 0], [], []>} : vector<8x256xf32>, vector<256x256xf32>, vector<8x256xf32> -> vector<8x256xf32>
    %c0_18 = arith.constant 0 : index
    %36 = memref.load %arg8[%c0_18] : memref<1xf32, #tpu.memory_space<smem>>
    %37 = vector.extract_strided_slice %35 {offsets = [0, 0], sizes = [4, 256], strides = [1, 1]} : vector<8x256xf32> to vector<4x256xf32>
    %38 = vector.broadcast %36 : f32 to vector<4x256xf32>
    %39 = arith.mulf %38, %37 : vector<4x256xf32>
    %cst_19 = arith.constant 1.000000e-03 : f32
    %40 = vector.broadcast %cst_19 : f32 to vector<4x256xf32>
    %41 = arith.mulf %9, %40 : vector<4x256xf32>
    %42 = arith.addf %39, %41 : vector<4x256xf32>
    %c0_20 = arith.constant 0 : index
    %c0_21 = arith.constant 0 : index
    %c0_22 = arith.constant 0 : index
    %43 = vector.load %arg9[%c0_20, %c0_21, %c0_22] : memref<1x4x256xf32, #tpu.memory_space<vmem>>, vector<1x4x256xf32>
    %44 = vector.shape_cast %43 : vector<1x4x256xf32> to vector<4x256xf32>
    %45 = vector.shape_cast %42 : vector<4x256xf32> to vector<1x4x256xf32>
    tpu.vector_store %arg9[%c0_20, %c0_21, %c0_22], %45 {strides = array<i32>} : memref<1x4x256xf32, #tpu.memory_space<vmem>>, vector<1x4x256xf32>,
    return
  }
  func.func @transform_0(%arg0: i32, %arg1: i32, %arg2: i32) -> (i32, i32, i32) {
    %c0_i32 = arith.constant 0 : i32
    %c0_i32_0 = arith.constant 0 : i32
    %c0_i32_1 = arith.constant 0 : i32
    return %arg0, %c0_i32, %c0_i32_0 : i32, i32, i32
  }
  func.func @transform_1(%arg0: i32, %arg1: i32, %arg2: i32) -> (i32, i32) {
    %c0_i32 = arith.constant 0 : i32
    %c0_i32_0 = arith.constant 0 : i32
    %c0_i32_1 = arith.constant 0 : i32
    return %c0_i32, %c0_i32_0 : i32, i32
  }
  func.func @transform_2(%arg0: i32, %arg1: i32, %arg2: i32) -> (i32, i32) {
    %c0_i32 = arith.constant 0 : i32
    %c0_i32_0 = arith.constant 0 : i32
    %c0_i32_1 = arith.constant 0 : i32
    return %c0_i32, %c0_i32_0 : i32, i32
  }
  func.func @transform_3(%arg0: i32, %arg1: i32, %arg2: i32) -> (i32, i32) {
    %c0_i32 = arith.constant 0 : i32
    %c0_i32_0 = arith.constant 0 : i32
    %c0_i32_1 = arith.constant 0 : i32
    return %c0_i32, %c0_i32_0 : i32, i32
  }
  func.func @transform_4(%arg0: i32, %arg1: i32, %arg2: i32) -> (i32, i32) {
    %c0_i32 = arith.constant 0 : i32
    %c0_i32_0 = arith.constant 0 : i32
    %c0_i32_1 = arith.constant 0 : i32
    return %c0_i32, %c0_i32_0 : i32, i32
  }
  func.func @transform_5(%arg0: i32, %arg1: i32, %arg2: i32) -> i32 {
    %c0_i32 = arith.constant 0 : i32
    %c0_i32_0 = arith.constant 0 : i32
    return %c0_i32 : i32
  }
  func.func @transform_6(%arg0: i32, %arg1: i32, %arg2: i32) -> (i32, i32, i32) {
    %c1_i32 = arith.constant 1 : i32
    %0 = arith.muli %arg1, %c1_i32 : i32
    %1 = arith.addi %0, %arg2 : i32
    %c0_i32 = arith.constant 0 : i32
    %c0_i32_0 = arith.constant 0 : i32
    return %arg0, %c0_i32, %1 : i32, i32, i32
  }
  func.func @transform_7(%arg0: i32, %arg1: i32, %arg2: i32) -> (i32, i32, i32) {
    %c1_i32 = arith.constant 1 : i32
    %0 = arith.muli %arg1, %c1_i32 : i32
    %1 = arith.addi %0, %arg2 : i32
    %c0_i32 = arith.constant 0 : i32
    %c0_i32_0 = arith.constant 0 : i32
    return %arg0, %1, %c0_i32 : i32, i32, i32
  }
}

</mosaic_0001>

<llo_original>
// kernel: tpu_custom_call.1
$region0: #{tpu_custom_call.1}
  #allocation0 [shape = 'u32[]', space=smem, size = 0x4, offset = 0x4, fixed_abs, tag = 'smem constant byte address 0x4 - core index']
  #allocation1 [shape = 'u32[144,128]{1,0:T(1,128)}', space=vmem, size = 0x12000, scoped, tag = 'internal scratch']
  #allocation2 [shape = 'f32[16,256]{1,0:T(8,128)}', space=vmem, size = 0x4000, scoped, tag = 'scratch operand']
  #allocation3 [shape = 'f32[1]{0:T(128)S(6)}', space=smem, size = 0x200, scoped, tag = 'scoped memory for tpu_custom_call.1']
  %s0 = inlined_call_operand.vmem [shape: f32[2,4,256], index: 0, kind: input, shape index: {}]
  %s1 = inlined_call_operand.vmem [shape: f32[8,4], index: 1, kind: input, shape index: {}]
  %s2 = inlined_call_operand.vmem [shape: f32[8,1], index: 2, kind: input, shape index: {}]
  %s3 = inlined_call_operand.vmem [shape: f32[16,4], index: 3, kind: input, shape index: {}]
  %s4 = inlined_call_operand.vmem [shape: f32[16,1], index: 4, kind: input, shape index: {}]
  %s5 = inlined_call_operand.<no memory space> [shape: f32[1], index: 5, kind: input, shape index: {}]
  %s6 = inlined_call_operand.hbm [shape: f32[2,4,256], index: 6, kind: output, shape index: {0}]
  %s7 = inlined_call_operand.hbm [shape: f32[2,256,256], index: 7, kind: output, shape index: {1}]
  %8 = xla_tuple %s6, %s7
  %s9 = sld [smem:[#allocation0]]
  $region69: #{tpu_custom_call.1} parent=0
    _
  %s11 = ssub.s32 1, %s9
  %s12 = scalar_select 0, %s11, %s9
  %13 = sst [smem:[#allocation3]] %s5
  $region1: #{tpu_custom_call.1} parent=0
    #allocation4 [shape = 'u8[8192]{0}', space=vmem, size = 0x2000, scoped, tag = 'output window, operand 0']
    #allocation5 [shape = 's32[2]{0}', space=sflag, size = 0x8, scoped, tag = 'scoped memory for tpu_custom_call.1']
    #allocation6 [shape = 'u8[524288]{0}', space=vmem, size = 0x80000, scoped, tag = 'output window, operand 1']
    #allocation7 [shape = 's32[2]{0}', space=sflag, size = 0x8, scoped, tag = 'scoped memory for tpu_custom_call.1']
    %14 = vsyncpa [#allocation5], 0
    %s15 = scalar_lea.sflag [#allocation5], 1
    %16 = vsyncpa %s15, 0
    %17 = vsyncpa [#allocation7], 0
    %s18 = scalar_lea.sflag [#allocation7], 1
    %19 = vsyncpa %s18, 0
    loop: start=0, step=1, limit=4
    $region2: #{tpu_custom_call.1} parent=1 // loop_pre_header
      _
    $region3: #{tpu_custom_call.1} parent=1 // loop_header
      %s21 = sphi 0, %s25
      %p22 = scmp.ge.s32.totalorder %s21, 4
      %s28 = sphi 0, %s47
      %s29 = sphi 0, %s43
      %s30 = sphi 0, %s39
      %s31 = sphi 0, %s28
      %s32 = sphi 0, %s29
      %s33 = sphi 0, %s30
      %s34 = sphi 0, %s31
      %s35 = sphi 0, %s32
      %s36 = sphi 0, %s33
      %s50 = sphi 0, %s52
      %s53 = sphi 0, %s50
      %s54 = sphi 0, %s53
      %s70 = sphi 0, %s54
      %s74 = sphi 0, %s74
      %s76 = sphi 0, %s74
      %s77 = sphi 0, %s76
      %s91 = sphi 0, %s77
      %s95 = sphi 0, %s95
      %s97 = sphi 0, %s95
      %s98 = sphi 0, %s97
      %s112 = sphi 0, %s98
      %s116 = sphi 0, %s116
      %s118 = sphi 0, %s116
      %s119 = sphi 0, %s118
      %s133 = sphi 0, %s119
      %s137 = sphi 0, %s137
      %s139 = sphi 0, %s137
      %s140 = sphi 0, %s139
      %s154 = sphi 0, %s140
      %s158 = sphi 0, %s158
      %s160 = sphi 0, %s158
      %s161 = sphi 0, %s160
      %s175 = sphi 0, %s161
      %s185 = sphi 0, %s187
      %s188 = sphi 0, %s185
      %s189 = sphi 0, %s188
      %s205 = sphi 0, %s189
      %s215 = sphi 0, %s217
      %s218 = sphi 0, %s215
      %s219 = sphi 0, %s218
      %s235 = sphi 0, %s219
    $region4: #{tpu_custom_call.1} parent=1 // loop_header_branch
      %24 = sbr.rel (%p22) target = $region8
    $region5: #{tpu_custom_call.1} parent=1 // loop_body
      %s26 = ssub.s32 %s21, 1
      %s27 = ssub.s32 %s21, 2
      %s37 = sadd.s32 1, %s30
      %p38 = scmp.ge.s32.totalorder %s37, 1
      %s39 = scalar_select %p38, 0, %s37
      %s40 = sadd.s32 1, %s29
      %s41 = scalar_select %p38, %s40, %s29
      %p42 = scmp.ge.s32.totalorder %s41, 1
      %s43 = scalar_select %p42, 0, %s41
      %s44 = sadd.s32 1, %s28
      %s45 = scalar_select %p42, %s44, %s28
      %p46 = scmp.ge.s32.totalorder %s45, 2
      %s47 = scalar_select %p46, 0, %s45
      %s48 = ssub.s32 %s28, %s47
      %p49 = scmp.eq.s32.totalorder %s48, 0
      %s51 = sadd.s32 %s50, 1
      %s52 = scalar_select %p49, %s50, %s51
      %p55 = pneg %p49
      %p56 = scmp.eq.s32.totalorder %s21, 1
      %p57 = por %p55, %p56
      %p58 = scmp.ne.s32.totalorder %s50, %s53
      %p59 = scmp.eq.s32.totalorder %s21, 0
      %p60 = por %p58, %p59
      %p61 = scmp.ne.s32.totalorder %s50, %s53
      %p62 = scmp.eq.s32.totalorder %s26, 1
      %p63 = por %p61, %p62
      %p64 = scmp.ne.s32.totalorder %s53, %s54
      %p65 = scmp.eq.s32.totalorder %s26, 0
      %p66 = por %p64, %p65
      %p67 = scmp.ne.s32.totalorder %s53, %s54
      %p68 = scmp.eq.s32.totalorder %s27, 1
      %p69 = por %p67, %p68
      %p71 = scmp.ne.s32.totalorder %s54, %s70
      %p72 = scmp.eq.s32.totalorder %s27, 0
      %p73 = por %p71, %p72
      %s75 = sadd.s32 %s74, 1
      %p78 = scmp.eq.s32.totalorder %s21, 1
      %p79 = scmp.ne.s32.totalorder %s74, %s76
      %p80 = scmp.eq.s32.totalorder %s21, 0
      %p81 = por %p79, %p80
      %p82 = scmp.ne.s32.totalorder %s74, %s76
      %p83 = scmp.eq.s32.totalorder %s26, 1
      %p84 = por %p82, %p83
      %p85 = scmp.ne.s32.totalorder %s76, %s77
      %p86 = scmp.eq.s32.totalorder %s26, 0
      %p87 = por %p85, %p86
      %p88 = scmp.ne.s32.totalorder %s76, %s77
      %p89 = scmp.eq.s32.totalorder %s27, 1
      %p90 = por %p88, %p89
      %p92 = scmp.ne.s32.totalorder %s77, %s91
      %p93 = scmp.eq.s32.totalorder %s27, 0
      %p94 = por %p92, %p93
      %s96 = sadd.s32 %s95, 1
      %p99 = scmp.eq.s32.totalorder %s21, 1
      %p100 = scmp.ne.s32.totalorder %s95, %s97
      %p101 = scmp.eq.s32.totalorder %s21, 0
      %p102 = por %p100, %p101
      %p103 = scmp.ne.s32.totalorder %s95, %s97
      %p104 = scmp.eq.s32.totalorder %s26, 1
      %p105 = por %p103, %p104
      %p106 = scmp.ne.s32.totalorder %s97, %s98
      %p107 = scmp.eq.s32.totalorder %s26, 0
      %p108 = por %p106, %p107
      %p109 = scmp.ne.s32.totalorder %s97, %s98
      %p110 = scmp.eq.s32.totalorder %s27, 1
      %p111 = por %p109, %p110
      %p113 = scmp.ne.s32.totalorder %s98, %s112
      %p114 = scmp.eq.s32.totalorder %s27, 0
      %p115 = por %p113, %p114
      %s117 = sadd.s32 %s116, 1
      %p120 = scmp.eq.s32.totalorder %s21, 1
      %p121 = scmp.ne.s32.totalorder %s116, %s118
      %p122 = scmp.eq.s32.totalorder %s21, 0
      %p123 = por %p121, %p122
      %p124 = scmp.ne.s32.totalorder %s116, %s118
      %p125 = scmp.eq.s32.totalorder %s26, 1
      %p126 = por %p124, %p125
      %p127 = scmp.ne.s32.totalorder %s118, %s119
      %p128 = scmp.eq.s32.totalorder %s26, 0
      %p129 = por %p127, %p128
      %p130 = scmp.ne.s32.totalorder %s118, %s119
      %p131 = scmp.eq.s32.totalorder %s27, 1
      %p132 = por %p130, %p131
      %p134 = scmp.ne.s32.totalorder %s119, %s133
      %p135 = scmp.eq.s32.totalorder %s27, 0
      %p136 = por %p134, %p135
      %s138 = sadd.s32 %s137, 1
      %p141 = scmp.eq.s32.totalorder %s21, 1
      %p142 = scmp.ne.s32.totalorder %s137, %s139
      %p143 = scmp.eq.s32.totalorder %s21, 0
      %p144 = por %p142, %p143
      %p145 = scmp.ne.s32.totalorder %s137, %s139
      %p146 = scmp.eq.s32.totalorder %s26, 1
      %p147 = por %p145, %p146
      %p148 = scmp.ne.s32.totalorder %s139, %s140
      %p149 = scmp.eq.s32.totalorder %s26, 0
      %p150 = por %p148, %p149
      %p151 = scmp.ne.s32.totalorder %s139, %s140
      %p152 = scmp.eq.s32.totalorder %s27, 1
      %p153 = por %p151, %p152
      %p155 = scmp.ne.s32.totalorder %s140, %s154
      %p156 = scmp.eq.s32.totalorder %s27, 0
      %p157 = por %p155, %p156
      %s159 = sadd.s32 %s158, 1
      %p162 = scmp.eq.s32.totalorder %s21, 1
      %p163 = scmp.ne.s32.totalorder %s158, %s160
      %p164 = scmp.eq.s32.totalorder %s21, 0
      %p165 = por %p163, %p164
      %p166 = scmp.ne.s32.totalorder %s158, %s160
      %p167 = scmp.eq.s32.totalorder %s26, 1
      %p168 = por %p166, %p167
      %p169 = scmp.ne.s32.totalorder %s160, %s161
      %p170 = scmp.eq.s32.totalorder %s26, 0
      %p171 = por %p169, %p170
      %p172 = scmp.ne.s32.totalorder %s160, %s161
      %p173 = scmp.eq.s32.totalorder %s27, 1
      %p174 = por %p172, %p173
      %p176 = scmp.ne.s32.totalorder %s161, %s175
      %p177 = scmp.eq.s32.totalorder %s27, 0
      %p178 = por %p176, %p177
      %s179 = sadd.s32 %s29, %s30
      %s180 = sadd.s32 %s43, %s39
      %s181 = ssub.s32 %s28, %s47
      %s182 = ssub.s32 %s179, %s180
      %s183 = sor.u32 %s181, %s182
      %p184 = scmp.eq.s32.totalorder %s183, 0
      %s186 = sadd.s32 %s185, 1
      %s187 = scalar_select %p184, %s185, %s186
      %p190 = pneg %p184
      %p191 = scmp.eq.s32.totalorder %s21, 1
      %p192 = por %p190, %p191
      %p193 = scmp.ne.s32.totalorder %s185, %s188
      %p194 = scmp.eq.s32.totalorder %s21, 0
      %p195 = por %p193, %p194
      %p196 = scmp.ne.s32.totalorder %s185, %s188
      %p197 = scmp.eq.s32.totalorder %s26, 1
      %p198 = por %p196, %p197
      %p199 = scmp.ne.s32.totalorder %s188, %s189
      %p200 = scmp.eq.s32.totalorder %s26, 0
      %p201 = por %p199, %p200
      %p202 = scmp.ne.s32.totalorder %s188, %s189
      %p203 = scmp.eq.s32.totalorder %s27, 1
      %p204 = por %p202, %p203
      %p206 = scmp.ne.s32.totalorder %s189, %s205
      %p207 = scmp.eq.s32.totalorder %s27, 0
      %p208 = por %p206, %p207
      %s209 = sadd.s32 %s29, %s30
      %s210 = sadd.s32 %s43, %s39
      %s211 = ssub.s32 %s28, %s47
      %s212 = ssub.s32 %s209, %s210
      %s213 = sor.u32 %s211, %s212
      %p214 = scmp.eq.s32.totalorder %s213, 0
      %s216 = sadd.s32 %s215, 1
      %s217 = scalar_select %p214, %s215, %s216
      %p220 = pneg %p214
      %p221 = scmp.eq.s32.totalorder %s21, 1
      %p222 = por %p220, %p221
      %p223 = scmp.ne.s32.totalorder %s215, %s218
      %p224 = scmp.eq.s32.totalorder %s21, 0
      %p225 = por %p223, %p224
      %p226 = scmp.ne.s32.totalorder %s215, %s218
      %p227 = scmp.eq.s32.totalorder %s26, 1
      %p228 = por %p226, %p227
      %p229 = scmp.ne.s32.totalorder %s218, %s219
      %p230 = scmp.eq.s32.totalorder %s26, 0
      %p231 = por %p229, %p230
      %p232 = scmp.ne.s32.totalorder %s218, %s219
      %p233 = scmp.eq.s32.totalorder %s27, 1
      %p234 = por %p232, %p233
      %p236 = scmp.ne.s32.totalorder %s219, %s235
      %p237 = scmp.eq.s32.totalorder %s27, 0
      %p238 = por %p236, %p237
      %p239 = scmp.le.s32.totalorder 1, %s21
      %p240 = scmp.lt.s32.totalorder %s21, 3
      %p241 = pnand %p239, %p240
      %p242 = pneg %p241
      // Predicated region
      $region9: #{tpu_custom_call.1} parent=5 // pred_check
        _
      $region10: #{tpu_custom_call.1} parent=5 // pred_check_branch
        %244 = sbr.rel (%p241) target = $region12
      $region11: #{tpu_custom_call.1} parent=5 // pred_region
        %s245 = ssub.s32 %s21, 1
        // Predicated region
        $region13: #{tpu_custom_call.1} parent=11 // pred_check
          %p246 = pneg %p87
        $region14: #{tpu_custom_call.1} parent=11 // pred_check_branch
          %248 = sbr.rel (%p246) target = $region16
        $region15: #{tpu_custom_call.1} parent=11 // pred_region
          _
        $region16: #{tpu_custom_call.1} parent=11 // pred_fallthru
          _
        // Predicated region
        $region17: #{tpu_custom_call.1} parent=11 // pred_check
          %p249 = pneg %p108
        $region18: #{tpu_custom_call.1} parent=11 // pred_check_branch
          %251 = sbr.rel (%p249) target = $region20
        $region19: #{tpu_custom_call.1} parent=11 // pred_region
          _
        $region20: #{tpu_custom_call.1} parent=11 // pred_fallthru
          _
        // Predicated region
        $region21: #{tpu_custom_call.1} parent=11 // pred_check
          %p252 = pneg %p129
        $region22: #{tpu_custom_call.1} parent=11 // pred_check_branch
          %254 = sbr.rel (%p252) target = $region24
        $region23: #{tpu_custom_call.1} parent=11 // pred_region
          _
        $region24: #{tpu_custom_call.1} parent=11 // pred_fallthru
          _
        // Predicated region
        $region25: #{tpu_custom_call.1} parent=11 // pred_check
          %p255 = pneg %p150
        $region26: #{tpu_custom_call.1} parent=11 // pred_check_branch
          %257 = sbr.rel (%p255) target = $region28
        $region27: #{tpu_custom_call.1} parent=11 // pred_region
          _
        $region28: #{tpu_custom_call.1} parent=11 // pred_fallthru
          _
        // Predicated region
        $region29: #{tpu_custom_call.1} parent=11 // pred_check
          %p258 = pneg %p171
        $region30: #{tpu_custom_call.1} parent=11 // pred_check_branch
          %260 = sbr.rel (%p258) target = $region32
        $region31: #{tpu_custom_call.1} parent=11 // pred_region
          _
        $region32: #{tpu_custom_call.1} parent=11 // pred_fallthru
          _
      $region12: #{tpu_custom_call.1} parent=5 // pred_fallthru
        _
      %p261 = scmp.lt.s32.totalorder %s21, 2
      // Predicated region
      $region33: #{tpu_custom_call.1} parent=5 // pred_check
        %p262 = pneg %p261
      $region34: #{tpu_custom_call.1} parent=5 // pred_check_branch
        %264 = sbr.rel (%p262) target = $region36
      $region35: #{tpu_custom_call.1} parent=5 // pred_region
        // Predicated region
        $region37: #{tpu_custom_call.1} parent=35 // pred_check
          %p265 = pneg %p60
        $region38: #{tpu_custom_call.1} parent=35 // pred_check_branch
          %267 = sbr.rel (%p265) target = $region40
        $region39: #{tpu_custom_call.1} parent=35 // pred_region
          %p268 = scmp.lt.s32.totalorder %s28, 1
          %s269 = scalar_select %p268, %s28, 1
          %s270 = smul.addr %s269, 2
          %s271 = smul.addr %s270, 4
          %s272 = scalar_lea.vmem %s0, %s271
        $region40: #{tpu_custom_call.1} parent=35 // pred_fallthru
          _
      $region36: #{tpu_custom_call.1} parent=5 // pred_fallthru
        _
      %p273 = scmp.le.s32.totalorder 1, %s21
      %p274 = scmp.lt.s32.totalorder %s21, 3
      %p275 = pnand %p273, %p274
      %p276 = pneg %p275
      // Predicated region
      $region41: #{tpu_custom_call.1} parent=5 // pred_check
        _
      $region42: #{tpu_custom_call.1} parent=5 // pred_check_branch
        %278 = sbr.rel (%p275) target = $region44
      $region43: #{tpu_custom_call.1} parent=5 // pred_region
        %s279 = ssub.s32 %s21, 1
        %p280 = scmp.lt.s32.totalorder %s31, 1
        %s281 = scalar_select %p280, %s31, 1
        %s282 = smul.addr %s281, 2
        %s283 = smul.addr %s282, 4
        %s284 = scalar_lea.vmem %s0, %s283
        %p285 = pneg %p66
        %p286 = pneg %p63
        %p287 = pneg %p87
        %p288 = pneg %p84
        %p289 = pneg %p108
        %p290 = pneg %p105
        %p291 = pneg %p129
        %p292 = pneg %p126
        %p293 = pneg %p150
        %p294 = pneg %p147
        %p295 = pneg %p171
        %p296 = pneg %p168
        %p297 = pneg %p201
        %p298 = pneg %p198
        %s299 = sand.u32 %s188, 1
        %s300 = scalar_lea.sflag [#allocation5], %s299
        %s301 = sand.u32 %s188, 1
        %s302 = smul.addr %s301, 8
        %s303 = scalar_lea.vmem [#allocation4], %s302
        %p304 = pneg %p231
        %p305 = pneg %p228
        %s306 = sand.u32 %s218, 1
        %s307 = scalar_lea.sflag [#allocation7], %s306
        %s308 = sand.u32 %s218, 1
        %s309 = smul.addr %s308, 512
        %s310 = scalar_lea.vmem [#allocation6], %s309
        %p311 = scmp.lt.s32.totalorder %s31, 1
        %s312 = scalar_select %p311, %s31, 1
        %s313 = smul.addr %s312, 2
        %s314 = smul.addr %s313, 4
        %s315 = scalar_lea.vmem %s0, %s314
        %s316 = sadd.s32 %s32, %s33
        %s317 = smul.u32 2, %s316
        %s318 = sadd.s32 %s32, %s33
        %s319 = smul.u32 32, %s318
        %p320 = scmp.eq.s32.totalorder %s33, 0
        // Predicated region
        $region45: #{tpu_custom_call.1} parent=43 // pred_check
          %p321 = pneg %p320
        $region46: #{tpu_custom_call.1} parent=43 // pred_check_branch
          %323 = sbr.rel (%p321) target = $region48
        $region47: #{tpu_custom_call.1} parent=43 // pred_region
          %v324 = vld [vmem:[%s3] sm:$0xff]
          %v325 = vld [vmem:[%s3 + $0x8] sm:$0xff]
          %v326 = vld [vmem:[%s315] sm:$0xff]
          %v327 = vld [vmem:[%s4] sm:$0xff]
          %v328 = vld [vmem:[%s4 + $0x8] sm:$0xff]
          %330 = vset.pattern.permute.xlu0 0
          %331 = vperm.xlu0 %330, %v327
          %v332 = vpop.permute.xlu0 %331
          %335 = vset.pattern.permute.xlu0 0
          %336 = vperm.xlu0 %335, %v328
          %v337 = vpop.permute.xlu0 %336
          %v340 = vcombine.high %v326, %v326
          %vm341 = vcmask 31744
          %v343 = vsel %vm341, %v324, 0
          %v346 = vsel %vm341, %v325, 0
          %vm348 = vcmask 1043456
          %v349 = vsel %vm348, %v326, 0
          %v351 = vsel %vm348, %v340, 0
          %353 = vmatprep.subr.mxu0 0.0
          %354 = vmatpush1.msra.mxu0 0.0
          %355 = vmatprep.subr.mxu0 0.0
          %356 = vmatpush1.msra.mxu0 0.0
          %357 = vmatprep.subr.mxu0 0.0
          %358 = vmatpush1.msra.mxu0 0.0
          %359 = vmatprep.subr.mxu0 0.0
          %360 = vmatpush1.msra.mxu0 0.0
          %361 = vmatprep.subr.mxu0 0.0
          %362 = vmatpush1.msra.mxu0 0.0
          %363 = vmatprep.subr.mxu0 0.0
          %364 = vmatpush1.msra.mxu0 0.0
          %365 = vmatprep.subr.mxu0 0.0
          %366 = vmatpush1.msra.mxu0 0.0
          %367 = vmatprep.subr.mxu0 0.0
          %368 = vmatpush1.msra.mxu0 0.0
          %369 = vmatprep.subr.mxu0 0.0
          %370 = vmatpush1.msra.mxu0 0.0
          %371 = vmatprep.subr.mxu0 0.0
          %372 = vmatpush1.msra.mxu0 0.0
          %373 = vmatprep.subr.mxu0 0.0
          %374 = vmatpush1.msra.mxu0 0.0
          %375 = vmatprep.subr.mxu0 0.0
          %376 = vmatpush1.msra.mxu0 0.0
          %377 = vmatprep.subr.mxu0 0.0
          %378 = vmatpush1.msra.mxu0 0.0
          %379 = vmatprep.subr.mxu0 0.0
          %380 = vmatpush1.msra.mxu0 0.0
          %381 = vmatprep.subr.mxu0 0.0
          %382 = vmatpush1.msra.mxu0 0.0
          %383 = vmatprep.subr.mxu0 %v351
          %384 = vmatpush1.msra.mxu0 %v349
          %385 = vmatprep.subr.mxu0 0.0
          %386 = vmatpush2.msra.mxu0 0.0
          %387 = vmatprep.subr.mxu0 0.0
          %388 = vmatpush2.msra.mxu0 0.0
          %389 = vmatprep.subr.mxu0 0.0
          %390 = vmatpush2.msra.mxu0 0.0
          %391 = vmatprep.subr.mxu0 0.0
          %392 = vmatpush2.msra.mxu0 0.0
          %393 = vmatprep.subr.mxu0 0.0
          %394 = vmatpush2.msra.mxu0 0.0
          %395 = vmatprep.subr.mxu0 0.0
          %396 = vmatpush2.msra.mxu0 0.0
          %397 = vmatprep.subr.mxu0 0.0
          %398 = vmatpush2.msra.mxu0 0.0
          %399 = vmatprep.subr.mxu0 0.0
          %400 = vmatpush2.msra.mxu0 0.0
          %401 = vmatprep.subr.mxu0 0.0
          %402 = vmatpush2.msra.mxu0 0.0
          %403 = vmatprep.subr.mxu0 0.0
          %404 = vmatpush2.msra.mxu0 0.0
          %405 = vmatprep.subr.mxu0 0.0
          %406 = vmatpush2.msra.mxu0 0.0
          %407 = vmatprep.subr.mxu0 0.0
          %408 = vmatpush2.msra.mxu0 0.0
          %409 = vmatprep.subr.mxu0 0.0
          %410 = vmatpush2.msra.mxu0 0.0
          %411 = vmatprep.subr.mxu0 0.0
          %412 = vmatpush2.msra.mxu0 0.0
          %413 = vmatprep.subr.mxu0 0.0
          %414 = vmatpush2.msra.mxu0 0.0
          %415 = vmatprep.subr.mxu0 0.0
          %416 = vmatpush2.msra.mxu0 0.0
          %417 = vmatprep.mubr.f32.mxu0 0.0
          %418 = vmatmul.mubr.f32.gmra.mxu0 %v343
          %v419 = vpop.f32.mrf.mxu0
          %v420 = vadd.f32 %v332, %v419
          %v421 = vpop.f32.mrf.mxu0
          %v422 = vadd.f32 %v332, %v421
          %423 = vmatprep.mubr.f32.mxu0 0.0
          %424 = vmatmul.mubr.f32.gmra.mxu0 %v346
          %v425 = vpop.f32.mrf.mxu0
          %v426 = vadd.f32 %v337, %v425
          %v427 = vpop.f32.mrf.mxu0
          %v428 = vadd.f32 %v337, %v427
          %429 = vdwg.mxu0
          %430 = vst [vmem:[#allocation2] sm:$0xff] %v420
          %431 = vst [vmem:[#allocation2 + $0x8] sm:$0xff] %v422
          %432 = vst [vmem:[#allocation2 + $0x10] sm:$0xff] %v426
          %433 = vst [vmem:[#allocation2 + $0x18] sm:$0xff] %v428
        $region48: #{tpu_custom_call.1} parent=43 // pred_fallthru
          _
        %s434 = sadd.s32 %s32, %s33
        %s435 = smul.u32 %s434, 256
        %s436 = sshra.s32 %s435, 7
        %s437 = sand.u32 %s435, 127
        %s438 = smul.addr %s436, 4
        %s439 = scalar_lea.vmem %s315, %s438
        %v440 = vld [vmem:[%s439] sm:$0xff]
        %v441 = vld [vmem:[%s1] sm:$0xff]
        %v442 = vld [vmem:[%s2] sm:$0xff]
        %444 = vset.pattern.permute.xlu0 0
        %445 = vperm.xlu0 %444, %v442
        %v446 = vpop.permute.xlu0 %445
        %v449 = vcombine.high %v440, %v440
        %vm450 = vcmask 31744
        %v452 = vsel %vm450, %v441, 0
        %vm454 = vcmask 1043456
        %v455 = vsel %vm454, %v440, 0
        %v457 = vsel %vm454, %v449, 0
        %459 = vmatprep.subr.mxu0 0.0
        %460 = vmatpush1.msra.mxu0 0.0
        %461 = vmatprep.subr.mxu0 0.0
        %462 = vmatpush1.msra.mxu0 0.0
        %463 = vmatprep.subr.mxu0 0.0
        %464 = vmatpush1.msra.mxu0 0.0
        %465 = vmatprep.subr.mxu0 0.0
        %466 = vmatpush1.msra.mxu0 0.0
        %467 = vmatprep.subr.mxu0 0.0
        %468 = vmatpush1.msra.mxu0 0.0
        %469 = vmatprep.subr.mxu0 0.0
        %470 = vmatpush1.msra.mxu0 0.0
        %471 = vmatprep.subr.mxu0 0.0
        %472 = vmatpush1.msra.mxu0 0.0
        %473 = vmatprep.subr.mxu0 0.0
        %474 = vmatpush1.msra.mxu0 0.0
        %475 = vmatprep.subr.mxu0 0.0
        %476 = vmatpush1.msra.mxu0 0.0
        %477 = vmatprep.subr.mxu0 0.0
        %478 = vmatpush1.msra.mxu0 0.0
        %479 = vmatprep.subr.mxu0 0.0
        %480 = vmatpush1.msra.mxu0 0.0
        %481 = vmatprep.subr.mxu0 0.0
        %482 = vmatpush1.msra.mxu0 0.0
        %483 = vmatprep.subr.mxu0 0.0
        %484 = vmatpush1.msra.mxu0 0.0
        %485 = vmatprep.subr.mxu0 0.0
        %486 = vmatpush1.msra.mxu0 0.0
        %487 = vmatprep.subr.mxu0 0.0
        %488 = vmatpush1.msra.mxu0 0.0
        %489 = vmatprep.subr.mxu0 %v457
        %490 = vmatpush1.msra.mxu0 %v455
        %491 = vmatprep.subr.mxu0 0.0
        %492 = vmatpush2.msra.mxu0 0.0
        %493 = vmatprep.subr.mxu0 0.0
        %494 = vmatpush2.msra.mxu0 0.0
        %495 = vmatprep.subr.mxu0 0.0
        %496 = vmatpush2.msra.mxu0 0.0
        %497 = vmatprep.subr.mxu0 0.0
        %498 = vmatpush2.msra.mxu0 0.0
        %499 = vmatprep.subr.mxu0 0.0
        %500 = vmatpush2.msra.mxu0 0.0
        %501 = vmatprep.subr.mxu0 0.0
        %502 = vmatpush2.msra.mxu0 0.0
        %503 = vmatprep.subr.mxu0 0.0
        %504 = vmatpush2.msra.mxu0 0.0
        %505 = vmatprep.subr.mxu0 0.0
        %506 = vmatpush2.msra.mxu0 0.0
        %507 = vmatprep.subr.mxu0 0.0
        %508 = vmatpush2.msra.mxu0 0.0
        %509 = vmatprep.subr.mxu0 0.0
        %510 = vmatpush2.msra.mxu0 0.0
        %511 = vmatprep.subr.mxu0 0.0
        %512 = vmatpush2.msra.mxu0 0.0
        %513 = vmatprep.subr.mxu0 0.0
        %514 = vmatpush2.msra.mxu0 0.0
        %515 = vmatprep.subr.mxu0 0.0
        %516 = vmatpush2.msra.mxu0 0.0
        %517 = vmatprep.subr.mxu0 0.0
        %518 = vmatpush2.msra.mxu0 0.0
        %519 = vmatprep.subr.mxu0 0.0
        %520 = vmatpush2.msra.mxu0 0.0
        %521 = vmatprep.subr.mxu0 0.0
        %522 = vmatpush2.msra.mxu0 0.0
        %523 = vmatprep.mubr.f32.mxu0 0.0
        %524 = vmatmul.mubr.f32.gmra.mxu0 %v452
        %v525 = vpop.f32.mrf.mxu0
        %v526 = vadd.f32 %v446, %v525
        %v527 = vpop.f32.mrf.mxu0
        %v528 = vadd.f32 %v446, %v527
        %529 = vdwg.mxu0
        %v530 = vld [vmem:[#allocation2] sm:$0xff]
        %v531 = vld [vmem:[#allocation2 + $0x8] sm:$0xff]
        %v532 = vld [vmem:[#allocation2 + $0x10] sm:$0xff]
        %v533 = vld [vmem:[#allocation2 + $0x18] sm:$0xff]
        %534 = vxpose.xlu0.b32.start [1/16] %v526, 128
        %535 = vxpose.xlu0.b32.cont [2/16] 0.0, 128
        %536 = vxpose.xlu0.b32.cont [3/16] 0.0, 128
        %537 = vxpose.xlu0.b32.cont [4/16] 0.0, 128
        %538 = vxpose.xlu0.b32.cont [5/16] 0.0, 128
        %539 = vxpose.xlu0.b32.cont [6/16] 0.0, 128
        %540 = vxpose.xlu0.b32.cont [7/16] 0.0, 128
        %541 = vxpose.xlu0.b32.cont [8/16] 0.0, 128
        %542 = vxpose.xlu0.b32.cont [9/16] 0.0, 128
        %543 = vxpose.xlu0.b32.cont [10/16] 0.0, 128
        %544 = vxpose.xlu0.b32.cont [11/16] 0.0, 128
        %545 = vxpose.xlu0.b32.cont [12/16] 0.0, 128
        %546 = vxpose.xlu0.b32.cont [13/16] 0.0, 128
        %547 = vxpose.xlu0.b32.cont [14/16] 0.0, 128
        %548 = vxpose.xlu0.b32.cont [15/16] 0.0, 128
        %549 = vxpose.xlu0.b32.end [16/16] 0.0, 128
        %v550 = vpop.trf.xlu0
        %v551 = vpop.trf.xlu0
        %v552 = vpop.trf.xlu0
        %v553 = vpop.trf.xlu0
        %v554 = vpop.trf.xlu0
        %v555 = vpop.trf.xlu0
        %v556 = vpop.trf.xlu0
        %v557 = vpop.trf.xlu0
        %v558 = vpop.trf.xlu0
        %v559 = vpop.trf.xlu0
        %v560 = vpop.trf.xlu0
        %v561 = vpop.trf.xlu0
        %v562 = vpop.trf.xlu0
        %v563 = vpop.trf.xlu0
        %v564 = vpop.trf.xlu0
        %v565 = vpop.trf.xlu0
        %566 = vxpose.xlu0.b32.start [1/16] %v528, 128
        %567 = vxpose.xlu0.b32.cont [2/16] 0.0, 128
        %568 = vxpose.xlu0.b32.cont [3/16] 0.0, 128
        %569 = vxpose.xlu0.b32.cont [4/16] 0.0, 128
        %570 = vxpose.xlu0.b32.cont [5/16] 0.0, 128
        %571 = vxpose.xlu0.b32.cont [6/16] 0.0, 128
        %572 = vxpose.xlu0.b32.cont [7/16] 0.0, 128
        %573 = vxpose.xlu0.b32.cont [8/16] 0.0, 128
        %574 = vxpose.xlu0.b32.cont [9/16] 0.0, 128
        %575 = vxpose.xlu0.b32.cont [10/16] 0.0, 128
        %576 = vxpose.xlu0.b32.cont [11/16] 0.0, 128
        %577 = vxpose.xlu0.b32.cont [12/16] 0.0, 128
        %578 = vxpose.xlu0.b32.cont [13/16] 0.0, 128
        %579 = vxpose.xlu0.b32.cont [14/16] 0.0, 128
        %580 = vxpose.xlu0.b32.cont [15/16] 0.0, 128
        %581 = vxpose.xlu0.b32.end [16/16] 0.0, 128
        %v582 = vpop.trf.xlu0
        %v583 = vpop.trf.xlu0
        %v584 = vpop.trf.xlu0
        %v585 = vpop.trf.xlu0
        %v586 = vpop.trf.xlu0
        %v587 = vpop.trf.xlu0
        %v588 = vpop.trf.xlu0
        %v589 = vpop.trf.xlu0
        %v590 = vpop.trf.xlu0
        %v591 = vpop.trf.xlu0
        %v592 = vpop.trf.xlu0
        %v593 = vpop.trf.xlu0
        %v594 = vpop.trf.xlu0
        %v595 = vpop.trf.xlu0
        %v596 = vpop.trf.xlu0
        %v597 = vpop.trf.xlu0
        %vm598 = vcmask 64512
        %v600 = vsel %vm598, %v550, 0
        %v603 = vsel %vm598, %v551, 0
        %v606 = vsel %vm598, %v552, 0
        %v609 = vsel %vm598, %v553, 0
        %v612 = vsel %vm598, %v554, 0
        %v615 = vsel %vm598, %v555, 0
        %v618 = vsel %vm598, %v556, 0
        %v621 = vsel %vm598, %v557, 0
        %v624 = vsel %vm598, %v558, 0
        %v627 = vsel %vm598, %v559, 0
        %v630 = vsel %vm598, %v560, 0
        %v633 = vsel %vm598, %v561, 0
        %v636 = vsel %vm598, %v562, 0
        %v639 = vsel %vm598, %v563, 0
        %v642 = vsel %vm598, %v564, 0
        %v645 = vsel %vm598, %v565, 0
        %v648 = vsel %vm598, %v582, 0
        %v651 = vsel %vm598, %v583, 0
        %v654 = vsel %vm598, %v584, 0
        %v657 = vsel %vm598, %v585, 0
        %v660 = vsel %vm598, %v586, 0
        %v663 = vsel %vm598, %v587, 0
        %v666 = vsel %vm598, %v588, 0
        %v669 = vsel %vm598, %v589, 0
        %v672 = vsel %vm598, %v590, 0
        %v675 = vsel %vm598, %v591, 0
        %v678 = vsel %vm598, %v592, 0
        %v681 = vsel %vm598, %v593, 0
        %v684 = vsel %vm598, %v594, 0
        %v687 = vsel %vm598, %v595, 0
        %v690 = vsel %vm598, %v596, 0
        %v693 = vsel %vm598, %v597, 0
        %695 = vmatprep.subr.mxu0 0.0
        %696 = vmatpush1.msra.mxu0 0.0
        %697 = vmatprep.subr.mxu0 0.0
        %698 = vmatpush1.msra.mxu0 0.0
        %699 = vmatprep.subr.mxu0 0.0
        %700 = vmatpush1.msra.mxu0 0.0
        %701 = vmatprep.subr.mxu0 0.0
        %702 = vmatpush1.msra.mxu0 0.0
        %703 = vmatprep.subr.mxu0 0.0
        %704 = vmatpush1.msra.mxu0 0.0
        %705 = vmatprep.subr.mxu0 0.0
        %706 = vmatpush1.msra.mxu0 0.0
        %707 = vmatprep.subr.mxu0 0.0
        %708 = vmatpush1.msra.mxu0 0.0
        %709 = vmatprep.subr.mxu0 0.0
        %710 = vmatpush1.msra.mxu0 0.0
        %711 = vmatprep.subr.mxu0 0.0
        %712 = vmatpush1.msra.mxu0 0.0
        %713 = vmatprep.subr.mxu0 0.0
        %714 = vmatpush1.msra.mxu0 0.0
        %715 = vmatprep.subr.mxu0 0.0
        %716 = vmatpush1.msra.mxu0 0.0
        %717 = vmatprep.subr.mxu0 0.0
        %718 = vmatpush1.msra.mxu0 0.0
        %719 = vmatprep.subr.mxu0 0.0
        %720 = vmatpush1.msra.mxu0 0.0
        %721 = vmatprep.subr.mxu0 0.0
        %722 = vmatpush1.msra.mxu0 0.0
        %723 = vmatprep.subr.mxu0 0.0
        %724 = vmatpush1.msra.mxu0 0.0
        %725 = vmatprep.subr.mxu0 %v531
        %726 = vmatpush1.msra.mxu0 %v530
        %727 = vmatprep.subr.mxu0 0.0
        %728 = vmatpush2.msra.mxu0 0.0
        %729 = vmatprep.subr.mxu0 0.0
        %730 = vmatpush2.msra.mxu0 0.0
        %731 = vmatprep.subr.mxu0 0.0
        %732 = vmatpush2.msra.mxu0 0.0
        %733 = vmatprep.subr.mxu0 0.0
        %734 = vmatpush2.msra.mxu0 0.0
        %735 = vmatprep.subr.mxu0 0.0
        %736 = vmatpush2.msra.mxu0 0.0
        %737 = vmatprep.subr.mxu0 0.0
        %738 = vmatpush2.msra.mxu0 0.0
        %739 = vmatprep.subr.mxu0 0.0
        %740 = vmatpush2.msra.mxu0 0.0
        %741 = vmatprep.subr.mxu0 0.0
        %742 = vmatpush2.msra.mxu0 0.0
        %743 = vmatprep.subr.mxu0 0.0
        %744 = vmatpush2.msra.mxu0 0.0
        %745 = vmatprep.subr.mxu0 0.0
        %746 = vmatpush2.msra.mxu0 0.0
        %747 = vmatprep.subr.mxu0 0.0
        %748 = vmatpush2.msra.mxu0 0.0
        %749 = vmatprep.subr.mxu0 0.0
        %750 = vmatpush2.msra.mxu0 0.0
        %751 = vmatprep.subr.mxu0 0.0
        %752 = vmatpush2.msra.mxu0 0.0
        %753 = vmatprep.subr.mxu0 0.0
        %754 = vmatpush2.msra.mxu0 0.0
        %755 = vmatprep.subr.mxu0 0.0
        %756 = vmatpush2.msra.mxu0 0.0
        %757 = vmatprep.subr.mxu0 0.0
        %758 = vmatpush2.msra.mxu0 0.0
        %759 = vmatprep.mubr.f32.mxu0 0.0
        %760 = vmatmul.mubr.f32.gmra.mxu0 %v600
        %v761 = vpop.f32.mrf.mxu0
        %v762 = vadd.f32 0.0, %v761
        %v763 = vpop.f32.mrf.mxu0
        %v764 = vadd.f32 0.0, %v763
        %765 = vmatprep.mubr.f32.mxu0 0.0
        %766 = vmatmul.mubr.f32.gmra.mxu0 %v603
        %v767 = vpop.f32.mrf.mxu0
        %v768 = vadd.f32 0.0, %v767
        %v769 = vpop.f32.mrf.mxu0
        %v770 = vadd.f32 0.0, %v769
        %771 = vmatprep.mubr.f32.mxu0 0.0
        %772 = vmatmul.mubr.f32.gmra.mxu0 %v606
        %v773 = vpop.f32.mrf.mxu0
        %v774 = vadd.f32 0.0, %v773
        %v775 = vpop.f32.mrf.mxu0
        %v776 = vadd.f32 0.0, %v775
        %777 = vmatprep.mubr.f32.mxu0 0.0
        %778 = vmatmul.mubr.f32.gmra.mxu0 %v609
        %v779 = vpop.f32.mrf.mxu0
        %v780 = vadd.f32 0.0, %v779
        %v781 = vpop.f32.mrf.mxu0
        %v782 = vadd.f32 0.0, %v781
        %783 = vmatprep.mubr.f32.mxu0 0.0
        %784 = vmatmul.mubr.f32.gmra.mxu0 %v612
        %v785 = vpop.f32.mrf.mxu0
        %v786 = vadd.f32 0.0, %v785
        %v787 = vpop.f32.mrf.mxu0
        %v788 = vadd.f32 0.0, %v787
        %789 = vmatprep.mubr.f32.mxu0 0.0
        %790 = vmatmul.mubr.f32.gmra.mxu0 %v615
        %v791 = vpop.f32.mrf.mxu0
        %v792 = vadd.f32 0.0, %v791
        %v793 = vpop.f32.mrf.mxu0
        %v794 = vadd.f32 0.0, %v793
        %795 = vmatprep.mubr.f32.mxu0 0.0
        %796 = vmatmul.mubr.f32.gmra.mxu0 %v618
        %v797 = vpop.f32.mrf.mxu0
        %v798 = vadd.f32 0.0, %v797
        %v799 = vpop.f32.mrf.mxu0
        %v800 = vadd.f32 0.0, %v799
        %801 = vmatprep.mubr.f32.mxu0 0.0
        %802 = vmatmul.mubr.f32.gmra.mxu0 %v621
        %v803 = vpop.f32.mrf.mxu0
        %v804 = vadd.f32 0.0, %v803
        %v805 = vpop.f32.mrf.mxu0
        %v806 = vadd.f32 0.0, %v805
        %807 = vmatprep.mubr.f32.mxu0 0.0
        %808 = vmatmul.mubr.f32.gmra.mxu0 %v624
        %v809 = vpop.f32.mrf.mxu0
        %v810 = vadd.f32 0.0, %v809
        %v811 = vpop.f32.mrf.mxu0
        %v812 = vadd.f32 0.0, %v811
        %813 = vmatprep.mubr.f32.mxu0 0.0
        %814 = vmatmul.mubr.f32.gmra.mxu0 %v627
        %v815 = vpop.f32.mrf.mxu0
        %v816 = vadd.f32 0.0, %v815
        %v817 = vpop.f32.mrf.mxu0
        %v818 = vadd.f32 0.0, %v817
        %819 = vmatprep.mubr.f32.mxu0 0.0
        %820 = vmatmul.mubr.f32.gmra.mxu0 %v630
        %v821 = vpop.f32.mrf.mxu0
        %v822 = vadd.f32 0.0, %v821
        %v823 = vpop.f32.mrf.mxu0
        %v824 = vadd.f32 0.0, %v823
        %825 = vmatprep.mubr.f32.mxu0 0.0
        %826 = vmatmul.mubr.f32.gmra.mxu0 %v633
        %v827 = vpop.f32.mrf.mxu0
        %v828 = vadd.f32 0.0, %v827
        %v829 = vpop.f32.mrf.mxu0
        %v830 = vadd.f32 0.0, %v829
        %831 = vmatprep.mubr.f32.mxu0 0.0
        %832 = vmatmul.mubr.f32.gmra.mxu0 %v636
        %v833 = vpop.f32.mrf.mxu0
        %v834 = vadd.f32 0.0, %v833
        %v835 = vpop.f32.mrf.mxu0
        %v836 = vadd.f32 0.0, %v835
        %837 = vmatprep.mubr.f32.mxu0 0.0
        %838 = vmatmul.mubr.f32.gmra.mxu0 %v639
        %v839 = vpop.f32.mrf.mxu0
        %v840 = vadd.f32 0.0, %v839
        %v841 = vpop.f32.mrf.mxu0
        %v842 = vadd.f32 0.0, %v841
        %843 = vmatprep.mubr.f32.mxu0 0.0
        %844 = vmatmul.mubr.f32.gmra.mxu0 %v642
        %v845 = vpop.f32.mrf.mxu0
        %v846 = vadd.f32 0.0, %v845
        %v847 = vpop.f32.mrf.mxu0
        %v848 = vadd.f32 0.0, %v847
        %849 = vmatprep.mubr.f32.mxu0 0.0
        %850 = vmatmul.mubr.f32.gmra.mxu0 %v645
        %v851 = vpop.f32.mrf.mxu0
        %v852 = vadd.f32 0.0, %v851
        %v853 = vpop.f32.mrf.mxu0
        %v854 = vadd.f32 0.0, %v853
        %855 = vmatprep.mubr.f32.mxu0 0.0
        %856 = vmatmul.mubr.f32.gmra.mxu0 %v648
        %v857 = vpop.f32.mrf.mxu0
        %v858 = vadd.f32 0.0, %v857
        %v859 = vpop.f32.mrf.mxu0
        %v860 = vadd.f32 0.0, %v859
        %861 = vmatprep.mubr.f32.mxu0 0.0
        %862 = vmatmul.mubr.f32.gmra.mxu0 %v651
        %v863 = vpop.f32.mrf.mxu0
        %v864 = vadd.f32 0.0, %v863
        %v865 = vpop.f32.mrf.mxu0
        %v866 = vadd.f32 0.0, %v865
        %867 = vmatprep.mubr.f32.mxu0 0.0
        %868 = vmatmul.mubr.f32.gmra.mxu0 %v654
        %v869 = vpop.f32.mrf.mxu0
        %v870 = vadd.f32 0.0, %v869
        %v871 = vpop.f32.mrf.mxu0
        %v872 = vadd.f32 0.0, %v871
        %873 = vmatprep.mubr.f32.mxu0 0.0
        %874 = vmatmul.mubr.f32.gmra.mxu0 %v657
        %v875 = vpop.f32.mrf.mxu0
        %v876 = vadd.f32 0.0, %v875
        %v877 = vpop.f32.mrf.mxu0
        %v878 = vadd.f32 0.0, %v877
        %879 = vmatprep.mubr.f32.mxu0 0.0
        %880 = vmatmul.mubr.f32.gmra.mxu0 %v660
        %v881 = vpop.f32.mrf.mxu0
        %v882 = vadd.f32 0.0, %v881
        %v883 = vpop.f32.mrf.mxu0
        %v884 = vadd.f32 0.0, %v883
        %885 = vmatprep.mubr.f32.mxu0 0.0
        %886 = vmatmul.mubr.f32.gmra.mxu0 %v663
        %v887 = vpop.f32.mrf.mxu0
        %v888 = vadd.f32 0.0, %v887
        %v889 = vpop.f32.mrf.mxu0
        %v890 = vadd.f32 0.0, %v889
        %891 = vmatprep.mubr.f32.mxu0 0.0
        %892 = vmatmul.mubr.f32.gmra.mxu0 %v666
        %v893 = vpop.f32.mrf.mxu0
        %v894 = vadd.f32 0.0, %v893
        %v895 = vpop.f32.mrf.mxu0
        %v896 = vadd.f32 0.0, %v895
        %897 = vmatprep.mubr.f32.mxu0 0.0
        %898 = vmatmul.mubr.f32.gmra.mxu0 %v669
        %v899 = vpop.f32.mrf.mxu0
        %v900 = vadd.f32 0.0, %v899
        %v901 = vpop.f32.mrf.mxu0
        %v902 = vadd.f32 0.0, %v901
        %903 = vmatprep.mubr.f32.mxu0 0.0
        %904 = vmatmul.mubr.f32.gmra.mxu0 %v672
        %v905 = vpop.f32.mrf.mxu0
        %v906 = vadd.f32 0.0, %v905
        %v907 = vpop.f32.mrf.mxu0
        %v908 = vadd.f32 0.0, %v907
        %909 = vmatprep.mubr.f32.mxu0 0.0
        %910 = vmatmul.mubr.f32.gmra.mxu0 %v675
        %v911 = vpop.f32.mrf.mxu0
        %v912 = vadd.f32 0.0, %v911
        %v913 = vpop.f32.mrf.mxu0
        %v914 = vadd.f32 0.0, %v913
        %915 = vmatprep.mubr.f32.mxu0 0.0
        %916 = vmatmul.mubr.f32.gmra.mxu0 %v678
        %v917 = vpop.f32.mrf.mxu0
        %v918 = vadd.f32 0.0, %v917
        %v919 = vpop.f32.mrf.mxu0
        %v920 = vadd.f32 0.0, %v919
        %921 = vmatprep.mubr.f32.mxu0 0.0
        %922 = vmatmul.mubr.f32.gmra.mxu0 %v681
        %v923 = vpop.f32.mrf.mxu0
        %v924 = vadd.f32 0.0, %v923
        %v925 = vpop.f32.mrf.mxu0
        %v926 = vadd.f32 0.0, %v925
        %927 = vmatprep.mubr.f32.mxu0 0.0
        %928 = vmatmul.mubr.f32.gmra.mxu0 %v684
        %v929 = vpop.f32.mrf.mxu0
        %v930 = vadd.f32 0.0, %v929
        %v931 = vpop.f32.mrf.mxu0
        %v932 = vadd.f32 0.0, %v931
        %933 = vmatprep.mubr.f32.mxu0 0.0
        %934 = vmatmul.mubr.f32.gmra.mxu0 %v687
        %v935 = vpop.f32.mrf.mxu0
        %v936 = vadd.f32 0.0, %v935
        %v937 = vpop.f32.mrf.mxu0
        %v938 = vadd.f32 0.0, %v937
        %939 = vmatprep.mubr.f32.mxu0 0.0
        %940 = vmatmul.mubr.f32.gmra.mxu0 %v690
        %v941 = vpop.f32.mrf.mxu0
        %v942 = vadd.f32 0.0, %v941
        %v943 = vpop.f32.mrf.mxu0
        %v944 = vadd.f32 0.0, %v943
        %945 = vmatprep.mubr.f32.mxu0 0.0
        %946 = vmatmul.mubr.f32.gmra.mxu0 %v693
        %v947 = vpop.f32.mrf.mxu0
        %v948 = vadd.f32 0.0, %v947
        %v949 = vpop.f32.mrf.mxu0
        %v950 = vadd.f32 0.0, %v949
        %951 = vdwg.mxu0
        %v952 = vmax.f32 %v762, %v764
        %953 = vmax.xlane.f32.xlu0 %v952
        %v954 = vpop.xlane.xlu0 %953
        %v955 = vmax.f32 %v768, %v770
        %956 = vmax.xlane.f32.xlu0 %v955
        %v957 = vpop.xlane.xlu0 %956
        %v958 = vmax.f32 %v774, %v776
        %959 = vmax.xlane.f32.xlu0 %v958
        %v960 = vpop.xlane.xlu0 %959
        %v961 = vmax.f32 %v780, %v782
        %962 = vmax.xlane.f32.xlu0 %v961
        %v963 = vpop.xlane.xlu0 %962
        %v964 = vmax.f32 %v786, %v788
        %965 = vmax.xlane.f32.xlu0 %v964
        %v966 = vpop.xlane.xlu0 %965
        %v967 = vmax.f32 %v792, %v794
        %968 = vmax.xlane.f32.xlu0 %v967
        %v969 = vpop.xlane.xlu0 %968
        %v970 = vmax.f32 %v798, %v800
        %971 = vmax.xlane.f32.xlu0 %v970
        %v972 = vpop.xlane.xlu0 %971
        %v973 = vmax.f32 %v804, %v806
        %974 = vmax.xlane.f32.xlu0 %v973
        %v975 = vpop.xlane.xlu0 %974
        %v976 = vmax.f32 %v810, %v812
        %977 = vmax.xlane.f32.xlu0 %v976
        %v978 = vpop.xlane.xlu0 %977
        %v979 = vmax.f32 %v816, %v818
        %980 = vmax.xlane.f32.xlu0 %v979
        %v981 = vpop.xlane.xlu0 %980
        %v982 = vmax.f32 %v822, %v824
        %983 = vmax.xlane.f32.xlu0 %v982
        %v984 = vpop.xlane.xlu0 %983
        %v985 = vmax.f32 %v828, %v830
        %986 = vmax.xlane.f32.xlu0 %v985
        %v987 = vpop.xlane.xlu0 %986
        %v988 = vmax.f32 %v834, %v836
        %989 = vmax.xlane.f32.xlu0 %v988
        %v990 = vpop.xlane.xlu0 %989
        %v991 = vmax.f32 %v840, %v842
        %992 = vmax.xlane.f32.xlu0 %v991
        %v993 = vpop.xlane.xlu0 %992
        %v994 = vmax.f32 %v846, %v848
        %995 = vmax.xlane.f32.xlu0 %v994
        %v996 = vpop.xlane.xlu0 %995
        %v997 = vmax.f32 %v852, %v854
        %998 = vmax.xlane.f32.xlu0 %v997
        %v999 = vpop.xlane.xlu0 %998
        %v1000 = vmax.f32 %v858, %v860
        %1001 = vmax.xlane.f32.xlu0 %v1000
        %v1002 = vpop.xlane.xlu0 %1001
        %v1003 = vmax.f32 %v864, %v866
        %1004 = vmax.xlane.f32.xlu0 %v1003
        %v1005 = vpop.xlane.xlu0 %1004
        %v1006 = vmax.f32 %v870, %v872
        %1007 = vmax.xlane.f32.xlu0 %v1006
        %v1008 = vpop.xlane.xlu0 %1007
        %v1009 = vmax.f32 %v876, %v878
        %1010 = vmax.xlane.f32.xlu0 %v1009
        %v1011 = vpop.xlane.xlu0 %1010
        %v1012 = vmax.f32 %v882, %v884
        %1013 = vmax.xlane.f32.xlu0 %v1012
        %v1014 = vpop.xlane.xlu0 %1013
        %v1015 = vmax.f32 %v888, %v890
        %1016 = vmax.xlane.f32.xlu0 %v1015
        %v1017 = vpop.xlane.xlu0 %1016
        %v1018 = vmax.f32 %v894, %v896
        %1019 = vmax.xlane.f32.xlu0 %v1018
        %v1020 = vpop.xlane.xlu0 %1019
        %v1021 = vmax.f32 %v900, %v902
        %1022 = vmax.xlane.f32.xlu0 %v1021
        %v1023 = vpop.xlane.xlu0 %1022
        %v1024 = vmax.f32 %v906, %v908
        %1025 = vmax.xlane.f32.xlu0 %v1024
        %v1026 = vpop.xlane.xlu0 %1025
        %v1027 = vmax.f32 %v912, %v914
        %1028 = vmax.xlane.f32.xlu0 %v1027
        %v1029 = vpop.xlane.xlu0 %1028
        %v1030 = vmax.f32 %v918, %v920
        %1031 = vmax.xlane.f32.xlu0 %v1030
        %v1032 = vpop.xlane.xlu0 %1031
        %v1033 = vmax.f32 %v924, %v926
        %1034 = vmax.xlane.f32.xlu0 %v1033
        %v1035 = vpop.xlane.xlu0 %1034
        %v1036 = vmax.f32 %v930, %v932
        %1037 = vmax.xlane.f32.xlu0 %v1036
        %v1038 = vpop.xlane.xlu0 %1037
        %v1039 = vmax.f32 %v936, %v938
        %1040 = vmax.xlane.f32.xlu0 %v1039
        %v1041 = vpop.xlane.xlu0 %1040
        %v1042 = vmax.f32 %v942, %v944
        %1043 = vmax.xlane.f32.xlu0 %v1042
        %v1044 = vpop.xlane.xlu0 %1043
        %v1045 = vmax.f32 %v948, %v950
        %1046 = vmax.xlane.f32.xlu0 %v1045
        %v1047 = vpop.xlane.xlu0 %1046
        %v1048 = vsub.f32 %v762, %v954
        %v1049 = vsub.f32 %v764, %v954
        %v1050 = vsub.f32 %v768, %v957
        %v1051 = vsub.f32 %v770, %v957
        %v1052 = vsub.f32 %v774, %v960
        %v1053 = vsub.f32 %v776, %v960
        %v1054 = vsub.f32 %v780, %v963
        %v1055 = vsub.f32 %v782, %v963
        %v1056 = vsub.f32 %v786, %v966
        %v1057 = vsub.f32 %v788, %v966
        %v1058 = vsub.f32 %v792, %v969
        %v1059 = vsub.f32 %v794, %v969
        %v1060 = vsub.f32 %v798, %v972
        %v1061 = vsub.f32 %v800, %v972
        %v1062 = vsub.f32 %v804, %v975
        %v1063 = vsub.f32 %v806, %v975
        %v1064 = vsub.f32 %v810, %v978
        %v1065 = vsub.f32 %v812, %v978
        %v1066 = vsub.f32 %v816, %v981
        %v1067 = vsub.f32 %v818, %v981
        %v1068 = vsub.f32 %v822, %v984
        %v1069 = vsub.f32 %v824, %v984
        %v1070 = vsub.f32 %v828, %v987
        %v1071 = vsub.f32 %v830, %v987
        %v1072 = vsub.f32 %v834, %v990
        %v1073 = vsub.f32 %v836, %v990
        %v1074 = vsub.f32 %v840, %v993
        %v1075 = vsub.f32 %v842, %v993
        %v1076 = vsub.f32 %v846, %v996
        %v1077 = vsub.f32 %v848, %v996
        %v1078 = vsub.f32 %v852, %v999
        %v1079 = vsub.f32 %v854, %v999
        %v1080 = vsub.f32 %v858, %v1002
        %v1081 = vsub.f32 %v860, %v1002
        %v1082 = vsub.f32 %v864, %v1005
        %v1083 = vsub.f32 %v866, %v1005
        %v1084 = vsub.f32 %v870, %v1008
        %v1085 = vsub.f32 %v872, %v1008
        %v1086 = vsub.f32 %v876, %v1011
        %v1087 = vsub.f32 %v878, %v1011
        %v1088 = vsub.f32 %v882, %v1014
        %v1089 = vsub.f32 %v884, %v1014
        %v1090 = vsub.f32 %v888, %v1017
        %v1091 = vsub.f32 %v890, %v1017
        %v1092 = vsub.f32 %v894, %v1020
        %v1093 = vsub.f32 %v896, %v1020
        %v1094 = vsub.f32 %v900, %v1023
        %v1095 = vsub.f32 %v902, %v1023
        %v1096 = vsub.f32 %v906, %v1026
        %v1097 = vsub.f32 %v908, %v1026
        %v1098 = vsub.f32 %v912, %v1029
        %v1099 = vsub.f32 %v914, %v1029
        %v1100 = vsub.f32 %v918, %v1032
        %v1101 = vsub.f32 %v920, %v1032
        %v1102 = vsub.f32 %v924, %v1035
        %v1103 = vsub.f32 %v926, %v1035
        %v1104 = vsub.f32 %v930, %v1038
        %v1105 = vsub.f32 %v932, %v1038
        %v1106 = vsub.f32 %v936, %v1041
        %v1107 = vsub.f32 %v938, %v1041
        %v1108 = vsub.f32 %v942, %v1044
        %v1109 = vsub.f32 %v944, %v1044
        %v1110 = vsub.f32 %v948, %v1047
        %v1111 = vsub.f32 %v950, %v1047
        %v1112 = vmul.f32 %v1048, 1.442695
        %v1113 = vpow.pop %v1112
        %v1114 = vmul.f32 %v1049, 1.442695
        %v1115 = vpow.pop %v1114
        %v1116 = vmul.f32 %v1050, 1.442695
        %v1117 = vpow.pop %v1116
        %v1118 = vmul.f32 %v1051, 1.442695
        %v1119 = vpow.pop %v1118
        %v1120 = vmul.f32 %v1052, 1.442695
        %v1121 = vpow.pop %v1120
        %v1122 = vmul.f32 %v1053, 1.442695
        %v1123 = vpow.pop %v1122
        %v1124 = vmul.f32 %v1054, 1.442695
        %v1125 = vpow.pop %v1124
        %v1126 = vmul.f32 %v1055, 1.442695
        %v1127 = vpow.pop %v1126
        %v1128 = vmul.f32 %v1056, 1.442695
        %v1129 = vpow.pop %v1128
        %v1130 = vmul.f32 %v1057, 1.442695
        %v1131 = vpow.pop %v1130
        %v1132 = vmul.f32 %v1058, 1.442695
        %v1133 = vpow.pop %v1132
        %v1134 = vmul.f32 %v1059, 1.442695
        %v1135 = vpow.pop %v1134
        %v1136 = vmul.f32 %v1060, 1.442695
        %v1137 = vpow.pop %v1136
        %v1138 = vmul.f32 %v1061, 1.442695
        %v1139 = vpow.pop %v1138
        %v1140 = vmul.f32 %v1062, 1.442695
        %v1141 = vpow.pop %v1140
        %v1142 = vmul.f32 %v1063, 1.442695
        %v1143 = vpow.pop %v1142
        %v1144 = vmul.f32 %v1064, 1.442695
        %v1145 = vpow.pop %v1144
        %v1146 = vmul.f32 %v1065, 1.442695
        %v1147 = vpow.pop %v1146
        %v1148 = vmul.f32 %v1066, 1.442695
        %v1149 = vpow.pop %v1148
        %v1150 = vmul.f32 %v1067, 1.442695
        %v1151 = vpow.pop %v1150
        %v1152 = vmul.f32 %v1068, 1.442695
        %v1153 = vpow.pop %v1152
        %v1154 = vmul.f32 %v1069, 1.442695
        %v1155 = vpow.pop %v1154
        %v1156 = vmul.f32 %v1070, 1.442695
        %v1157 = vpow.pop %v1156
        %v1158 = vmul.f32 %v1071, 1.442695
        %v1159 = vpow.pop %v1158
        %v1160 = vmul.f32 %v1072, 1.442695
        %v1161 = vpow.pop %v1160
        %v1162 = vmul.f32 %v1073, 1.442695
        %v1163 = vpow.pop %v1162
        %v1164 = vmul.f32 %v1074, 1.442695
        %v1165 = vpow.pop %v1164
        %v1166 = vmul.f32 %v1075, 1.442695
        %v1167 = vpow.pop %v1166
        %v1168 = vmul.f32 %v1076, 1.442695
        %v1169 = vpow.pop %v1168
        %v1170 = vmul.f32 %v1077, 1.442695
        %v1171 = vpow.pop %v1170
        %v1172 = vmul.f32 %v1078, 1.442695
        %v1173 = vpow.pop %v1172
        %v1174 = vmul.f32 %v1079, 1.442695
        %v1175 = vpow.pop %v1174
        %v1176 = vmul.f32 %v1080, 1.442695
        %v1177 = vpow.pop %v1176
        %v1178 = vmul.f32 %v1081, 1.442695
        %v1179 = vpow.pop %v1178
        %v1180 = vmul.f32 %v1082, 1.442695
        %v1181 = vpow.pop %v1180
        %v1182 = vmul.f32 %v1083, 1.442695
        %v1183 = vpow.pop %v1182
        %v1184 = vmul.f32 %v1084, 1.442695
        %v1185 = vpow.pop %v1184
        %v1186 = vmul.f32 %v1085, 1.442695
        %v1187 = vpow.pop %v1186
        %v1188 = vmul.f32 %v1086, 1.442695
        %v1189 = vpow.pop %v1188
        %v1190 = vmul.f32 %v1087, 1.442695
        %v1191 = vpow.pop %v1190
        %v1192 = vmul.f32 %v1088, 1.442695
        %v1193 = vpow.pop %v1192
        %v1194 = vmul.f32 %v1089, 1.442695
        %v1195 = vpow.pop %v1194
        %v1196 = vmul.f32 %v1090, 1.442695
        %v1197 = vpow.pop %v1196
        %v1198 = vmul.f32 %v1091, 1.442695
        %v1199 = vpow.pop %v1198
        %v1200 = vmul.f32 %v1092, 1.442695
        %v1201 = vpow.pop %v1200
        %v1202 = vmul.f32 %v1093, 1.442695
        %v1203 = vpow.pop %v1202
        %v1204 = vmul.f32 %v1094, 1.442695
        %v1205 = vpow.pop %v1204
        %v1206 = vmul.f32 %v1095, 1.442695
        %v1207 = vpow.pop %v1206
        %v1208 = vmul.f32 %v1096, 1.442695
        %v1209 = vpow.pop %v1208
        %v1210 = vmul.f32 %v1097, 1.442695
        %v1211 = vpow.pop %v1210
        %v1212 = vmul.f32 %v1098, 1.442695
        %v1213 = vpow.pop %v1212
        %v1214 = vmul.f32 %v1099, 1.442695
        %v1215 = vpow.pop %v1214
        %v1216 = vmul.f32 %v1100, 1.442695
        %v1217 = vpow.pop %v1216
        %v1218 = vmul.f32 %v1101, 1.442695
        %v1219 = vpow.pop %v1218
        %v1220 = vmul.f32 %v1102, 1.442695
        %v1221 = vpow.pop %v1220
        %v1222 = vmul.f32 %v1103, 1.442695
        %v1223 = vpow.pop %v1222
        %v1224 = vmul.f32 %v1104, 1.442695
        %v1225 = vpow.pop %v1224
        %v1226 = vmul.f32 %v1105, 1.442695
        %v1227 = vpow.pop %v1226
        %v1228 = vmul.f32 %v1106, 1.442695
        %v1229 = vpow.pop %v1228
        %v1230 = vmul.f32 %v1107, 1.442695
        %v1231 = vpow.pop %v1230
        %v1232 = vmul.f32 %v1108, 1.442695
        %v1233 = vpow.pop %v1232
        %v1234 = vmul.f32 %v1109, 1.442695
        %v1235 = vpow.pop %v1234
        %v1236 = vmul.f32 %v1110, 1.442695
        %v1237 = vpow.pop %v1236
        %v1238 = vmul.f32 %v1111, 1.442695
        %v1239 = vpow.pop %v1238
        %1240 = vmatprep.subr.mxu0 0.0
        %1241 = vmatpush1.msra.mxu0 1.0
        %1242 = vmatprep.subr.mxu0 0.0
        %1243 = vmatpush1.msra.mxu0 1.0
        %1244 = vmatprep.subr.mxu0 0.0
        %1245 = vmatpush1.msra.mxu0 1.0
        %1246 = vmatprep.subr.mxu0 0.0
        %1247 = vmatpush1.msra.mxu0 1.0
        %1248 = vmatprep.subr.mxu0 0.0
        %1249 = vmatpush1.msra.mxu0 1.0
        %1250 = vmatprep.subr.mxu0 0.0
        %1251 = vmatpush1.msra.mxu0 1.0
        %1252 = vmatprep.subr.mxu0 0.0
        %1253 = vmatpush1.msra.mxu0 1.0
        %1254 = vmatprep.subr.mxu0 0.0
        %1255 = vmatpush1.msra.mxu0 1.0
        %1256 = vmatprep.subr.mxu0 0.0
        %1257 = vmatpush1.msra.mxu0 1.0
        %1258 = vmatprep.subr.mxu0 0.0
        %1259 = vmatpush1.msra.mxu0 1.0
        %1260 = vmatprep.subr.mxu0 0.0
        %1261 = vmatpush1.msra.mxu0 1.0
        %1262 = vmatprep.subr.mxu0 0.0
        %1263 = vmatpush1.msra.mxu0 1.0
        %1264 = vmatprep.subr.mxu0 0.0
        %1265 = vmatpush1.msra.mxu0 1.0
        %1266 = vmatprep.subr.mxu0 0.0
        %1267 = vmatpush1.msra.mxu0 1.0
        %1268 = vmatprep.subr.mxu0 0.0
        %1269 = vmatpush1.msra.mxu0 1.0
        %1270 = vmatprep.subr.mxu0 0.0
        %1271 = vmatpush1.msra.mxu0 1.0
        %1272 = vmatprep.subr.mxu0 0.0
        %1273 = vmatpush2.msra.mxu0 1.0
        %1274 = vmatprep.subr.mxu0 0.0
        %1275 = vmatpush2.msra.mxu0 1.0
        %1276 = vmatprep.subr.mxu0 0.0
        %1277 = vmatpush2.msra.mxu0 1.0
        %1278 = vmatprep.subr.mxu0 0.0
        %1279 = vmatpush2.msra.mxu0 1.0
        %1280 = vmatprep.subr.mxu0 0.0
        %1281 = vmatpush2.msra.mxu0 1.0
        %1282 = vmatprep.subr.mxu0 0.0
        %1283 = vmatpush2.msra.mxu0 1.0
        %1284 = vmatprep.subr.mxu0 0.0
        %1285 = vmatpush2.msra.mxu0 1.0
        %1286 = vmatprep.subr.mxu0 0.0
        %1287 = vmatpush2.msra.mxu0 1.0
        %1288 = vmatprep.subr.mxu0 0.0
        %1289 = vmatpush2.msra.mxu0 1.0
        %1290 = vmatprep.subr.mxu0 0.0
        %1291 = vmatpush2.msra.mxu0 1.0
        %1292 = vmatprep.subr.mxu0 0.0
        %1293 = vmatpush2.msra.mxu0 1.0
        %1294 = vmatprep.subr.mxu0 0.0
        %1295 = vmatpush2.msra.mxu0 1.0
        %1296 = vmatprep.subr.mxu0 0.0
        %1297 = vmatpush2.msra.mxu0 1.0
        %1298 = vmatprep.subr.mxu0 0.0
        %1299 = vmatpush2.msra.mxu0 1.0
        %1300 = vmatprep.subr.mxu0 0.0
        %1301 = vmatpush2.msra.mxu0 1.0
        %1302 = vmatprep.subr.mxu0 0.0
        %1303 = vmatpush2.msra.mxu0 1.0
        %1304 = vmatprep.mubr.f32.mxu0 %v1115
        %1305 = vmatmul.mubr.f32.gmra.mxu0 %v1113
        %v1306 = vpop.f32.mrf.mxu0
        %v1307 = vadd.f32 0.0, %v1306
        %v1308 = vpop.f32.mrf.mxu0
        %1309 = vmatprep.mubr.f32.mxu0 %v1119
        %1310 = vmatmul.mubr.f32.gmra.mxu0 %v1117
        %v1311 = vpop.f32.mrf.mxu0
        %v1312 = vadd.f32 0.0, %v1311
        %v1313 = vpop.f32.mrf.mxu0
        %1314 = vmatprep.mubr.f32.mxu0 %v1123
        %1315 = vmatmul.mubr.f32.gmra.mxu0 %v1121
        %v1316 = vpop.f32.mrf.mxu0
        %v1317 = vadd.f32 0.0, %v1316
        %v1318 = vpop.f32.mrf.mxu0
        %1319 = vmatprep.mubr.f32.mxu0 %v1127
        %1320 = vmatmul.mubr.f32.gmra.mxu0 %v1125
        %v1321 = vpop.f32.mrf.mxu0
        %v1322 = vadd.f32 0.0, %v1321
        %v1323 = vpop.f32.mrf.mxu0
        %1324 = vmatprep.mubr.f32.mxu0 %v1131
        %1325 = vmatmul.mubr.f32.gmra.mxu0 %v1129
        %v1326 = vpop.f32.mrf.mxu0
        %v1327 = vadd.f32 0.0, %v1326
        %v1328 = vpop.f32.mrf.mxu0
        %1329 = vmatprep.mubr.f32.mxu0 %v1135
        %1330 = vmatmul.mubr.f32.gmra.mxu0 %v1133
        %v1331 = vpop.f32.mrf.mxu0
        %v1332 = vadd.f32 0.0, %v1331
        %v1333 = vpop.f32.mrf.mxu0
        %1334 = vmatprep.mubr.f32.mxu0 %v1139
        %1335 = vmatmul.mubr.f32.gmra.mxu0 %v1137
        %v1336 = vpop.f32.mrf.mxu0
        %v1337 = vadd.f32 0.0, %v1336
        %v1338 = vpop.f32.mrf.mxu0
        %1339 = vmatprep.mubr.f32.mxu0 %v1143
        %1340 = vmatmul.mubr.f32.gmra.mxu0 %v1141
        %v1341 = vpop.f32.mrf.mxu0
        %v1342 = vadd.f32 0.0, %v1341
        %v1343 = vpop.f32.mrf.mxu0
        %1344 = vmatprep.mubr.f32.mxu0 %v1147
        %1345 = vmatmul.mubr.f32.gmra.mxu0 %v1145
        %v1346 = vpop.f32.mrf.mxu0
        %v1347 = vadd.f32 0.0, %v1346
        %v1348 = vpop.f32.mrf.mxu0
        %1349 = vmatprep.mubr.f32.mxu0 %v1151
        %1350 = vmatmul.mubr.f32.gmra.mxu0 %v1149
        %v1351 = vpop.f32.mrf.mxu0
        %v1352 = vadd.f32 0.0, %v1351
        %v1353 = vpop.f32.mrf.mxu0
        %1354 = vmatprep.mubr.f32.mxu0 %v1155
        %1355 = vmatmul.mubr.f32.gmra.mxu0 %v1153
        %v1356 = vpop.f32.mrf.mxu0
        %v1357 = vadd.f32 0.0, %v1356
        %v1358 = vpop.f32.mrf.mxu0
        %1359 = vmatprep.mubr.f32.mxu0 %v1159
        %1360 = vmatmul.mubr.f32.gmra.mxu0 %v1157
        %v1361 = vpop.f32.mrf.mxu0
        %v1362 = vadd.f32 0.0, %v1361
        %v1363 = vpop.f32.mrf.mxu0
        %1364 = vmatprep.mubr.f32.mxu0 %v1163
        %1365 = vmatmul.mubr.f32.gmra.mxu0 %v1161
        %v1366 = vpop.f32.mrf.mxu0
        %v1367 = vadd.f32 0.0, %v1366
        %v1368 = vpop.f32.mrf.mxu0
        %1369 = vmatprep.mubr.f32.mxu0 %v1167
        %1370 = vmatmul.mubr.f32.gmra.mxu0 %v1165
        %v1371 = vpop.f32.mrf.mxu0
        %v1372 = vadd.f32 0.0, %v1371
        %v1373 = vpop.f32.mrf.mxu0
        %1374 = vmatprep.mubr.f32.mxu0 %v1171
        %1375 = vmatmul.mubr.f32.gmra.mxu0 %v1169
        %v1376 = vpop.f32.mrf.mxu0
        %v1377 = vadd.f32 0.0, %v1376
        %v1378 = vpop.f32.mrf.mxu0
        %1379 = vmatprep.mubr.f32.mxu0 %v1175
        %1380 = vmatmul.mubr.f32.gmra.mxu0 %v1173
        %v1381 = vpop.f32.mrf.mxu0
        %v1382 = vadd.f32 0.0, %v1381
        %v1383 = vpop.f32.mrf.mxu0
        %1384 = vmatprep.mubr.f32.mxu0 %v1179
        %1385 = vmatmul.mubr.f32.gmra.mxu0 %v1177
        %v1386 = vpop.f32.mrf.mxu0
        %v1387 = vadd.f32 0.0, %v1386
        %v1388 = vpop.f32.mrf.mxu0
        %1389 = vmatprep.mubr.f32.mxu0 %v1183
        %1390 = vmatmul.mubr.f32.gmra.mxu0 %v1181
        %v1391 = vpop.f32.mrf.mxu0
        %v1392 = vadd.f32 0.0, %v1391
        %v1393 = vpop.f32.mrf.mxu0
        %1394 = vmatprep.mubr.f32.mxu0 %v1187
        %1395 = vmatmul.mubr.f32.gmra.mxu0 %v1185
        %v1396 = vpop.f32.mrf.mxu0
        %v1397 = vadd.f32 0.0, %v1396
        %v1398 = vpop.f32.mrf.mxu0
        %1399 = vmatprep.mubr.f32.mxu0 %v1191
        %1400 = vmatmul.mubr.f32.gmra.mxu0 %v1189
        %v1401 = vpop.f32.mrf.mxu0
        %v1402 = vadd.f32 0.0, %v1401
        %v1403 = vpop.f32.mrf.mxu0
        %1404 = vmatprep.mubr.f32.mxu0 %v1195
        %1405 = vmatmul.mubr.f32.gmra.mxu0 %v1193
        %v1406 = vpop.f32.mrf.mxu0
        %v1407 = vadd.f32 0.0, %v1406
        %v1408 = vpop.f32.mrf.mxu0
        %1409 = vmatprep.mubr.f32.mxu0 %v1199
        %1410 = vmatmul.mubr.f32.gmra.mxu0 %v1197
        %v1411 = vpop.f32.mrf.mxu0
        %v1412 = vadd.f32 0.0, %v1411
        %v1413 = vpop.f32.mrf.mxu0
        %1414 = vmatprep.mubr.f32.mxu0 %v1203
        %1415 = vmatmul.mubr.f32.gmra.mxu0 %v1201
        %v1416 = vpop.f32.mrf.mxu0
        %v1417 = vadd.f32 0.0, %v1416
        %v1418 = vpop.f32.mrf.mxu0
        %1419 = vmatprep.mubr.f32.mxu0 %v1207
        %1420 = vmatmul.mubr.f32.gmra.mxu0 %v1205
        %v1421 = vpop.f32.mrf.mxu0
        %v1422 = vadd.f32 0.0, %v1421
        %v1423 = vpop.f32.mrf.mxu0
        %1424 = vmatprep.mubr.f32.mxu0 %v1211
        %1425 = vmatmul.mubr.f32.gmra.mxu0 %v1209
        %v1426 = vpop.f32.mrf.mxu0
        %v1427 = vadd.f32 0.0, %v1426
        %v1428 = vpop.f32.mrf.mxu0
        %1429 = vmatprep.mubr.f32.mxu0 %v1215
        %1430 = vmatmul.mubr.f32.gmra.mxu0 %v1213
        %v1431 = vpop.f32.mrf.mxu0
        %v1432 = vadd.f32 0.0, %v1431
        %v1433 = vpop.f32.mrf.mxu0
        %1434 = vmatprep.mubr.f32.mxu0 %v1219
        %1435 = vmatmul.mubr.f32.gmra.mxu0 %v1217
        %v1436 = vpop.f32.mrf.mxu0
        %v1437 = vadd.f32 0.0, %v1436
        %v1438 = vpop.f32.mrf.mxu0
        %1439 = vmatprep.mubr.f32.mxu0 %v1223
        %1440 = vmatmul.mubr.f32.gmra.mxu0 %v1221
        %v1441 = vpop.f32.mrf.mxu0
        %v1442 = vadd.f32 0.0, %v1441
        %v1443 = vpop.f32.mrf.mxu0
        %1444 = vmatprep.mubr.f32.mxu0 %v1227
        %1445 = vmatmul.mubr.f32.gmra.mxu0 %v1225
        %v1446 = vpop.f32.mrf.mxu0
        %v1447 = vadd.f32 0.0, %v1446
        %v1448 = vpop.f32.mrf.mxu0
        %1449 = vmatprep.mubr.f32.mxu0 %v1231
        %1450 = vmatmul.mubr.f32.gmra.mxu0 %v1229
        %v1451 = vpop.f32.mrf.mxu0
        %v1452 = vadd.f32 0.0, %v1451
        %v1453 = vpop.f32.mrf.mxu0
        %1454 = vmatprep.mubr.f32.mxu0 %v1235
        %1455 = vmatmul.mubr.f32.gmra.mxu0 %v1233
        %v1456 = vpop.f32.mrf.mxu0
        %v1457 = vadd.f32 0.0, %v1456
        %v1458 = vpop.f32.mrf.mxu0
        %1459 = vmatprep.mubr.f32.mxu0 %v1239
        %1460 = vmatmul.mubr.f32.gmra.mxu0 %v1237
        %v1461 = vpop.f32.mrf.mxu0
        %v1462 = vadd.f32 0.0, %v1461
        %v1463 = vpop.f32.mrf.mxu0
        %1464 = vdwg.mxu0
        %v1465 = vrcp.pop %v1307
        %v1466 = vrcp.pop %v1312
        %v1467 = vrcp.pop %v1317
        %v1468 = vrcp.pop %v1322
        %v1469 = vrcp.pop %v1327
        %v1470 = vrcp.pop %v1332
        %v1471 = vrcp.pop %v1337
        %v1472 = vrcp.pop %v1342
        %v1473 = vrcp.pop %v1347
        %v1474 = vrcp.pop %v1352
        %v1475 = vrcp.pop %v1357
        %v1476 = vrcp.pop %v1362
        %v1477 = vrcp.pop %v1367
        %v1478 = vrcp.pop %v1372
        %v1479 = vrcp.pop %v1377
        %v1480 = vrcp.pop %v1382
        %v1481 = vrcp.pop %v1387
        %v1482 = vrcp.pop %v1392
        %v1483 = vrcp.pop %v1397
        %v1484 = vrcp.pop %v1402
        %v1485 = vrcp.pop %v1407
        %v1486 = vrcp.pop %v1412
        %v1487 = vrcp.pop %v1417
        %v1488 = vrcp.pop %v1422
        %v1489 = vrcp.pop %v1427
        %v1490 = vrcp.pop %v1432
        %v1491 = vrcp.pop %v1437
        %v1492 = vrcp.pop %v1442
        %v1493 = vrcp.pop %v1447
        %v1494 = vrcp.pop %v1452
        %v1495 = vrcp.pop %v1457
        %v1496 = vrcp.pop %v1462
        %v1497 = vmul.f32 %v1307, %v1465
        %v1498 = vmul.f32 %v1312, %v1466
        %v1499 = vmul.f32 %v1317, %v1467
        %v1500 = vmul.f32 %v1322, %v1468
        %v1501 = vmul.f32 %v1327, %v1469
        %v1502 = vmul.f32 %v1332, %v1470
        %v1503 = vmul.f32 %v1337, %v1471
        %v1504 = vmul.f32 %v1342, %v1472
        %v1505 = vmul.f32 %v1347, %v1473
        %v1506 = vmul.f32 %v1352, %v1474
        %v1507 = vmul.f32 %v1357, %v1475
        %v1508 = vmul.f32 %v1362, %v1476
        %v1509 = vmul.f32 %v1367, %v1477
        %v1510 = vmul.f32 %v1372, %v1478
        %v1511 = vmul.f32 %v1377, %v1479
        %v1512 = vmul.f32 %v1382, %v1480
        %v1513 = vmul.f32 %v1387, %v1481
        %v1514 = vmul.f32 %v1392, %v1482
        %v1515 = vmul.f32 %v1397, %v1483
        %v1516 = vmul.f32 %v1402, %v1484
        %v1517 = vmul.f32 %v1407, %v1485
        %v1518 = vmul.f32 %v1412, %v1486
        %v1519 = vmul.f32 %v1417, %v1487
        %v1520 = vmul.f32 %v1422, %v1488
        %v1521 = vmul.f32 %v1427, %v1489
        %v1522 = vmul.f32 %v1432, %v1490
        %v1523 = vmul.f32 %v1437, %v1491
        %v1524 = vmul.f32 %v1442, %v1492
        %v1525 = vmul.f32 %v1447, %v1493
        %v1526 = vmul.f32 %v1452, %v1494
        %v1527 = vmul.f32 %v1457, %v1495
        %v1528 = vmul.f32 %v1462, %v1496
        %v1529 = vsub.f32 2.0, %v1497
        %v1530 = vsub.f32 2.0, %v1498
        %v1531 = vsub.f32 2.0, %v1499
        %v1532 = vsub.f32 2.0, %v1500
        %v1533 = vsub.f32 2.0, %v1501
        %v1534 = vsub.f32 2.0, %v1502
        %v1535 = vsub.f32 2.0, %v1503
        %v1536 = vsub.f32 2.0, %v1504
        %v1537 = vsub.f32 2.0, %v1505
        %v1538 = vsub.f32 2.0, %v1506
        %v1539 = vsub.f32 2.0, %v1507
        %v1540 = vsub.f32 2.0, %v1508
        %v1541 = vsub.f32 2.0, %v1509
        %v1542 = vsub.f32 2.0, %v1510
        %v1543 = vsub.f32 2.0, %v1511
        %v1544 = vsub.f32 2.0, %v1512
        %v1545 = vsub.f32 2.0, %v1513
        %v1546 = vsub.f32 2.0, %v1514
        %v1547 = vsub.f32 2.0, %v1515
        %v1548 = vsub.f32 2.0, %v1516
        %v1549 = vsub.f32 2.0, %v1517
        %v1550 = vsub.f32 2.0, %v1518
        %v1551 = vsub.f32 2.0, %v1519
        %v1552 = vsub.f32 2.0, %v1520
        %v1553 = vsub.f32 2.0, %v1521
        %v1554 = vsub.f32 2.0, %v1522
        %v1555 = vsub.f32 2.0, %v1523
        %v1556 = vsub.f32 2.0, %v1524
        %v1557 = vsub.f32 2.0, %v1525
        %v1558 = vsub.f32 2.0, %v1526
        %v1559 = vsub.f32 2.0, %v1527
        %v1560 = vsub.f32 2.0, %v1528
        %v1561 = vmul.f32 %v1465, %v1529
        %v1562 = vmul.f32 %v1466, %v1530
        %v1563 = vmul.f32 %v1467, %v1531
        %v1564 = vmul.f32 %v1468, %v1532
        %v1565 = vmul.f32 %v1469, %v1533
        %v1566 = vmul.f32 %v1470, %v1534
        %v1567 = vmul.f32 %v1471, %v1535
        %v1568 = vmul.f32 %v1472, %v1536
        %v1569 = vmul.f32 %v1473, %v1537
        %v1570 = vmul.f32 %v1474, %v1538
        %v1571 = vmul.f32 %v1475, %v1539
        %v1572 = vmul.f32 %v1476, %v1540
        %v1573 = vmul.f32 %v1477, %v1541
        %v1574 = vmul.f32 %v1478, %v1542
        %v1575 = vmul.f32 %v1479, %v1543
        %v1576 = vmul.f32 %v1480, %v1544
        %v1577 = vmul.f32 %v1481, %v1545
        %v1578 = vmul.f32 %v1482, %v1546
        %v1579 = vmul.f32 %v1483, %v1547
        %v1580 = vmul.f32 %v1484, %v1548
        %v1581 = vmul.f32 %v1485, %v1549
        %v1582 = vmul.f32 %v1486, %v1550
        %v1583 = vmul.f32 %v1487, %v1551
        %v1584 = vmul.f32 %v1488, %v1552
        %v1585 = vmul.f32 %v1489, %v1553
        %v1586 = vmul.f32 %v1490, %v1554
        %v1587 = vmul.f32 %v1491, %v1555
        %v1588 = vmul.f32 %v1492, %v1556
        %v1589 = vmul.f32 %v1493, %v1557
        %v1590 = vmul.f32 %v1494, %v1558
        %v1591 = vmul.f32 %v1495, %v1559
        %v1592 = vmul.f32 %v1496, %v1560
        %1594 = vset.pattern.permute.xlu0 0
        %1595 = vperm.xlu0 %1594, %v1561
        %v1596 = vpop.permute.xlu0 %1595
        %1599 = vset.pattern.permute.xlu0 0
        %1600 = vperm.xlu0 %1599, %v1562
        %v1601 = vpop.permute.xlu0 %1600
        %1604 = vset.pattern.permute.xlu0 0
        %1605 = vperm.xlu0 %1604, %v1563
        %v1606 = vpop.permute.xlu0 %1605
        %1609 = vset.pattern.permute.xlu0 0
        %1610 = vperm.xlu0 %1609, %v1564
        %v1611 = vpop.permute.xlu0 %1610
        %1614 = vset.pattern.permute.xlu0 0
        %1615 = vperm.xlu0 %1614, %v1565
        %v1616 = vpop.permute.xlu0 %1615
        %1619 = vset.pattern.permute.xlu0 0
        %1620 = vperm.xlu0 %1619, %v1566
        %v1621 = vpop.permute.xlu0 %1620
        %1624 = vset.pattern.permute.xlu0 0
        %1625 = vperm.xlu0 %1624, %v1567
        %v1626 = vpop.permute.xlu0 %1625
        %1629 = vset.pattern.permute.xlu0 0
        %1630 = vperm.xlu0 %1629, %v1568
        %v1631 = vpop.permute.xlu0 %1630
        %1634 = vset.pattern.permute.xlu0 0
        %1635 = vperm.xlu0 %1634, %v1569
        %v1636 = vpop.permute.xlu0 %1635
        %1639 = vset.pattern.permute.xlu0 0
        %1640 = vperm.xlu0 %1639, %v1570
        %v1641 = vpop.permute.xlu0 %1640
        %1644 = vset.pattern.permute.xlu0 0
        %1645 = vperm.xlu0 %1644, %v1571
        %v1646 = vpop.permute.xlu0 %1645
        %1649 = vset.pattern.permute.xlu0 0
        %1650 = vperm.xlu0 %1649, %v1572
        %v1651 = vpop.permute.xlu0 %1650
        %1654 = vset.pattern.permute.xlu0 0
        %1655 = vperm.xlu0 %1654, %v1573
        %v1656 = vpop.permute.xlu0 %1655
        %1659 = vset.pattern.permute.xlu0 0
        %1660 = vperm.xlu0 %1659, %v1574
        %v1661 = vpop.permute.xlu0 %1660
        %1664 = vset.pattern.permute.xlu0 0
        %1665 = vperm.xlu0 %1664, %v1575
        %v1666 = vpop.permute.xlu0 %1665
        %1669 = vset.pattern.permute.xlu0 0
        %1670 = vperm.xlu0 %1669, %v1576
        %v1671 = vpop.permute.xlu0 %1670
        %1674 = vset.pattern.permute.xlu0 0
        %1675 = vperm.xlu0 %1674, %v1577
        %v1676 = vpop.permute.xlu0 %1675
        %1679 = vset.pattern.permute.xlu0 0
        %1680 = vperm.xlu0 %1679, %v1578
        %v1681 = vpop.permute.xlu0 %1680
        %1684 = vset.pattern.permute.xlu0 0
        %1685 = vperm.xlu0 %1684, %v1579
        %v1686 = vpop.permute.xlu0 %1685
        %1689 = vset.pattern.permute.xlu0 0
        %1690 = vperm.xlu0 %1689, %v1580
        %v1691 = vpop.permute.xlu0 %1690
        %1694 = vset.pattern.permute.xlu0 0
        %1695 = vperm.xlu0 %1694, %v1581
        %v1696 = vpop.permute.xlu0 %1695
        %1699 = vset.pattern.permute.xlu0 0
        %1700 = vperm.xlu0 %1699, %v1582
        %v1701 = vpop.permute.xlu0 %1700
        %1704 = vset.pattern.permute.xlu0 0
        %1705 = vperm.xlu0 %1704, %v1583
        %v1706 = vpop.permute.xlu0 %1705
        %1709 = vset.pattern.permute.xlu0 0
        %1710 = vperm.xlu0 %1709, %v1584
        %v1711 = vpop.permute.xlu0 %1710
        %1714 = vset.pattern.permute.xlu0 0
        %1715 = vperm.xlu0 %1714, %v1585
        %v1716 = vpop.permute.xlu0 %1715
        %1719 = vset.pattern.permute.xlu0 0
        %1720 = vperm.xlu0 %1719, %v1586
        %v1721 = vpop.permute.xlu0 %1720
        %1724 = vset.pattern.permute.xlu0 0
        %1725 = vperm.xlu0 %1724, %v1587
        %v1726 = vpop.permute.xlu0 %1725
        %1729 = vset.pattern.permute.xlu0 0
        %1730 = vperm.xlu0 %1729, %v1588
        %v1731 = vpop.permute.xlu0 %1730
        %1734 = vset.pattern.permute.xlu0 0
        %1735 = vperm.xlu0 %1734, %v1589
        %v1736 = vpop.permute.xlu0 %1735
        %1739 = vset.pattern.permute.xlu0 0
        %1740 = vperm.xlu0 %1739, %v1590
        %v1741 = vpop.permute.xlu0 %1740
        %1744 = vset.pattern.permute.xlu0 0
        %1745 = vperm.xlu0 %1744, %v1591
        %v1746 = vpop.permute.xlu0 %1745
        %1749 = vset.pattern.permute.xlu0 0
        %1750 = vperm.xlu0 %1749, %v1592
        %v1751 = vpop.permute.xlu0 %1750
        %v1753 = vmul.f32 %v1113, %v1596
        %v1754 = vmul.f32 %v1115, %v1596
        %v1755 = vmul.f32 %v1117, %v1601
        %v1756 = vmul.f32 %v1119, %v1601
        %v1757 = vmul.f32 %v1121, %v1606
        %v1758 = vmul.f32 %v1123, %v1606
        %v1759 = vmul.f32 %v1125, %v1611
        %v1760 = vmul.f32 %v1127, %v1611
        %v1761 = vmul.f32 %v1129, %v1616
        %v1762 = vmul.f32 %v1131, %v1616
        %v1763 = vmul.f32 %v1133, %v1621
        %v1764 = vmul.f32 %v1135, %v1621
        %v1765 = vmul.f32 %v1137, %v1626
        %v1766 = vmul.f32 %v1139, %v1626
        %v1767 = vmul.f32 %v1141, %v1631
        %v1768 = vmul.f32 %v1143, %v1631
        %v1769 = vmul.f32 %v1145, %v1636
        %v1770 = vmul.f32 %v1147, %v1636
        %v1771 = vmul.f32 %v1149, %v1641
        %v1772 = vmul.f32 %v1151, %v1641
        %v1773 = vmul.f32 %v1153, %v1646
        %v1774 = vmul.f32 %v1155, %v1646
        %v1775 = vmul.f32 %v1157, %v1651
        %v1776 = vmul.f32 %v1159, %v1651
        %v1777 = vmul.f32 %v1161, %v1656
        %v1778 = vmul.f32 %v1163, %v1656
        %v1779 = vmul.f32 %v1165, %v1661
        %v1780 = vmul.f32 %v1167, %v1661
        %v1781 = vmul.f32 %v1169, %v1666
        %v1782 = vmul.f32 %v1171, %v1666
        %v1783 = vmul.f32 %v1173, %v1671
        %v1784 = vmul.f32 %v1175, %v1671
        %v1785 = vmul.f32 %v1177, %v1676
        %v1786 = vmul.f32 %v1179, %v1676
        %v1787 = vmul.f32 %v1181, %v1681
        %v1788 = vmul.f32 %v1183, %v1681
        %v1789 = vmul.f32 %v1185, %v1686
        %v1790 = vmul.f32 %v1187, %v1686
        %v1791 = vmul.f32 %v1189, %v1691
        %v1792 = vmul.f32 %v1191, %v1691
        %v1793 = vmul.f32 %v1193, %v1696
        %v1794 = vmul.f32 %v1195, %v1696
        %v1795 = vmul.f32 %v1197, %v1701
        %v1796 = vmul.f32 %v1199, %v1701
        %v1797 = vmul.f32 %v1201, %v1706
        %v1798 = vmul.f32 %v1203, %v1706
        %v1799 = vmul.f32 %v1205, %v1711
        %v1800 = vmul.f32 %v1207, %v1711
        %v1801 = vmul.f32 %v1209, %v1716
        %v1802 = vmul.f32 %v1211, %v1716
        %v1803 = vmul.f32 %v1213, %v1721
        %v1804 = vmul.f32 %v1215, %v1721
        %v1805 = vmul.f32 %v1217, %v1726
        %v1806 = vmul.f32 %v1219, %v1726
        %v1807 = vmul.f32 %v1221, %v1731
        %v1808 = vmul.f32 %v1223, %v1731
        %v1809 = vmul.f32 %v1225, %v1736
        %v1810 = vmul.f32 %v1227, %v1736
        %v1811 = vmul.f32 %v1229, %v1741
        %v1812 = vmul.f32 %v1231, %v1741
        %v1813 = vmul.f32 %v1233, %v1746
        %v1814 = vmul.f32 %v1235, %v1746
        %v1815 = vmul.f32 %v1237, %v1751
        %v1816 = vmul.f32 %v1239, %v1751
        %1817 = vst [vmem:[%s310] sm:$0xff] %v1753
        %1818 = vst [vmem:[%s310 + $0x8] sm:$0xff] %v1754
        %1819 = vst [vmem:[%s310 + $0x10] sm:$0xff] %v1755
        %1820 = vst [vmem:[%s310 + $0x18] sm:$0xff] %v1756
        %1821 = vst [vmem:[%s310 + $0x20] sm:$0xff] %v1757
        %1822 = vst [vmem:[%s310 + $0x28] sm:$0xff] %v1758
        %1823 = vst [vmem:[%s310 + $0x30] sm:$0xff] %v1759
        %1824 = vst [vmem:[%s310 + $0x38] sm:$0xff] %v1760
        %1825 = vst [vmem:[%s310 + $0x40] sm:$0xff] %v1761
        %1826 = vst [vmem:[%s310 + $0x48] sm:$0xff] %v1762
        %1827 = vst [vmem:[%s310 + $0x50] sm:$0xff] %v1763
        %1828 = vst [vmem:[%s310 + $0x58] sm:$0xff] %v1764
        %1829 = vst [vmem:[%s310 + $0x60] sm:$0xff] %v1765
        %1830 = vst [vmem:[%s310 + $0x68] sm:$0xff] %v1766
        %1831 = vst [vmem:[%s310 + $0x70] sm:$0xff] %v1767
        %1832 = vst [vmem:[%s310 + $0x78] sm:$0xff] %v1768
        %1833 = vst [vmem:[%s310 + $0x80] sm:$0xff] %v1769
        %1834 = vst [vmem:[%s310 + $0x88] sm:$0xff] %v1770
        %1835 = vst [vmem:[%s310 + $0x90] sm:$0xff] %v1771
        %1836 = vst [vmem:[%s310 + $0x98] sm:$0xff] %v1772
        %1837 = vst [vmem:[%s310 + $0xa0] sm:$0xff] %v1773
        %1838 = vst [vmem:[%s310 + $0xa8] sm:$0xff] %v1774
        %1839 = vst [vmem:[%s310 + $0xb0] sm:$0xff] %v1775
        %1840 = vst [vmem:[%s310 + $0xb8] sm:$0xff] %v1776
        %1841 = vst [vmem:[%s310 + $0xc0] sm:$0xff] %v1777
        %1842 = vst [vmem:[%s310 + $0xc8] sm:$0xff] %v1778
        %1843 = vst [vmem:[%s310 + $0xd0] sm:$0xff] %v1779
        %1844 = vst [vmem:[%s310 + $0xd8] sm:$0xff] %v1780
        %1845 = vst [vmem:[%s310 + $0xe0] sm:$0xff] %v1781
        %1846 = vst [vmem:[%s310 + $0xe8] sm:$0xff] %v1782
        %1847 = vst [vmem:[%s310 + $0xf0] sm:$0xff] %v1783
        %1848 = vst [vmem:[%s310 + $0xf8] sm:$0xff] %v1784
        %1849 = vst [vmem:[%s310 + $0x100] sm:$0xff] %v1785
        %1850 = vst [vmem:[%s310 + $0x108] sm:$0xff] %v1786
        %1851 = vst [vmem:[%s310 + $0x110] sm:$0xff] %v1787
        %1852 = vst [vmem:[%s310 + $0x118] sm:$0xff] %v1788
        %1853 = vst [vmem:[%s310 + $0x120] sm:$0xff] %v1789
        %1854 = vst [vmem:[%s310 + $0x128] sm:$0xff] %v1790
        %1855 = vst [vmem:[%s310 + $0x130] sm:$0xff] %v1791
        %1856 = vst [vmem:[%s310 + $0x138] sm:$0xff] %v1792
        %1857 = vst [vmem:[%s310 + $0x140] sm:$0xff] %v1793
        %1858 = vst [vmem:[%s310 + $0x148] sm:$0xff] %v1794
        %1859 = vst [vmem:[%s310 + $0x150] sm:$0xff] %v1795
        %1860 = vst [vmem:[%s310 + $0x158] sm:$0xff] %v1796
        %1861 = vst [vmem:[%s310 + $0x160] sm:$0xff] %v1797
        %1862 = vst [vmem:[%s310 + $0x168] sm:$0xff] %v1798
        %1863 = vst [vmem:[%s310 + $0x170] sm:$0xff] %v1799
        %1864 = vst [vmem:[%s310 + $0x178] sm:$0xff] %v1800
        %1865 = vst [vmem:[%s310 + $0x180] sm:$0xff] %v1801
        %1866 = vst [vmem:[%s310 + $0x188] sm:$0xff] %v1802
        %1867 = vst [vmem:[%s310 + $0x190] sm:$0xff] %v1803
        %1868 = vst [vmem:[%s310 + $0x198] sm:$0xff] %v1804
        %1869 = vst [vmem:[%s310 + $0x1a0] sm:$0xff] %v1805
        %1870 = vst [vmem:[%s310 + $0x1a8] sm:$0xff] %v1806
        %1871 = vst [vmem:[%s310 + $0x1b0] sm:$0xff] %v1807
        %1872 = vst [vmem:[%s310 + $0x1b8] sm:$0xff] %v1808
        %1873 = vst [vmem:[%s310 + $0x1c0] sm:$0xff] %v1809
        %1874 = vst [vmem:[%s310 + $0x1c8] sm:$0xff] %v1810
        %1875 = vst [vmem:[%s310 + $0x1d0] sm:$0xff] %v1811
        %1876 = vst [vmem:[%s310 + $0x1d8] sm:$0xff] %v1812
        %1877 = vst [vmem:[%s310 + $0x1e0] sm:$0xff] %v1813
        %1878 = vst [vmem:[%s310 + $0x1e8] sm:$0xff] %v1814
        %1879 = vst [vmem:[%s310 + $0x1f0] sm:$0xff] %v1815
        %1880 = vst [vmem:[%s310 + $0x1f8] sm:$0xff] %v1816
        %1881 = vmatprep.subr.mxu0 %v1784
        %1882 = vmatpush1.xpose.msra.mxu0 %v1783
        %1883 = vmatprep.subr.mxu0 %v1782
        %1884 = vmatpush1.xpose.msra.mxu0 %v1781
        %1885 = vmatprep.subr.mxu0 %v1780
        %1886 = vmatpush1.xpose.msra.mxu0 %v1779
        %1887 = vmatprep.subr.mxu0 %v1778
        %1888 = vmatpush1.xpose.msra.mxu0 %v1777
        %1889 = vmatprep.subr.mxu0 %v1776
        %1890 = vmatpush1.xpose.msra.mxu0 %v1775
        %1891 = vmatprep.subr.mxu0 %v1774
        %1892 = vmatpush1.xpose.msra.mxu0 %v1773
        %1893 = vmatprep.subr.mxu0 %v1772
        %1894 = vmatpush1.xpose.msra.mxu0 %v1771
        %1895 = vmatprep.subr.mxu0 %v1770
        %1896 = vmatpush1.xpose.msra.mxu0 %v1769
        %1897 = vmatprep.subr.mxu0 %v1768
        %1898 = vmatpush1.xpose.msra.mxu0 %v1767
        %1899 = vmatprep.subr.mxu0 %v1766
        %1900 = vmatpush1.xpose.msra.mxu0 %v1765
        %1901 = vmatprep.subr.mxu0 %v1764
        %1902 = vmatpush1.xpose.msra.mxu0 %v1763
        %1903 = vmatprep.subr.mxu0 %v1762
        %1904 = vmatpush1.xpose.msra.mxu0 %v1761
        %1905 = vmatprep.subr.mxu0 %v1760
        %1906 = vmatpush1.xpose.msra.mxu0 %v1759
        %1907 = vmatprep.subr.mxu0 %v1758
        %1908 = vmatpush1.xpose.msra.mxu0 %v1757
        %1909 = vmatprep.subr.mxu0 %v1756
        %1910 = vmatpush1.xpose.msra.mxu0 %v1755
        %1911 = vmatprep.subr.mxu0 %v1754
        %1912 = vmatpush1.xpose.msra.mxu0 %v1753
        %1913 = vmatprep.subr.mxu0 %v1816
        %1914 = vmatpush2.xpose.msra.mxu0 %v1815
        %1915 = vmatprep.subr.mxu0 %v1814
        %1916 = vmatpush2.xpose.msra.mxu0 %v1813
        %1917 = vmatprep.subr.mxu0 %v1812
        %1918 = vmatpush2.xpose.msra.mxu0 %v1811
        %1919 = vmatprep.subr.mxu0 %v1810
        %1920 = vmatpush2.xpose.msra.mxu0 %v1809
        %1921 = vmatprep.subr.mxu0 %v1808
        %1922 = vmatpush2.xpose.msra.mxu0 %v1807
        %1923 = vmatprep.subr.mxu0 %v1806
        %1924 = vmatpush2.xpose.msra.mxu0 %v1805
        %1925 = vmatprep.subr.mxu0 %v1804
        %1926 = vmatpush2.xpose.msra.mxu0 %v1803
        %1927 = vmatprep.subr.mxu0 %v1802
        %1928 = vmatpush2.xpose.msra.mxu0 %v1801
        %1929 = vmatprep.subr.mxu0 %v1800
        %1930 = vmatpush2.xpose.msra.mxu0 %v1799
        %1931 = vmatprep.subr.mxu0 %v1798
        %1932 = vmatpush2.xpose.msra.mxu0 %v1797
        %1933 = vmatprep.subr.mxu0 %v1796
        %1934 = vmatpush2.xpose.msra.mxu0 %v1795
        %1935 = vmatprep.subr.mxu0 %v1794
        %1936 = vmatpush2.xpose.msra.mxu0 %v1793
        %1937 = vmatprep.subr.mxu0 %v1792
        %1938 = vmatpush2.xpose.msra.mxu0 %v1791
        %1939 = vmatprep.subr.mxu0 %v1790
        %1940 = vmatpush2.xpose.msra.mxu0 %v1789
        %1941 = vmatprep.subr.mxu0 %v1788
        %1942 = vmatpush2.xpose.msra.mxu0 %v1787
        %1943 = vmatprep.subr.mxu0 %v1786
        %1944 = vmatpush2.xpose.msra.mxu0 %v1785
        %1945 = vmatprep.mubr.f32.mxu0 %v533
        %1946 = vmatmul.mubr.f32.gmra.mxu0 %v532
        %v1947 = vpop.f32.mrf.mxu0
        %v1948 = vadd.f32 0.0, %v1947
        %v1949 = vpop.f32.mrf.mxu0
        %v1950 = vadd.f32 0.0, %v1949
        %1951 = vdwg.mxu0
        %s1952 = sld [smem:[#allocation3]]
        %v1953 = vstv %s1952
        %v1954 = vmul.f32 %v1953, %v1948
        %v1955 = vmul.f32 %v1953, %v1950
        %v1956 = vmul.f32 %v440, 0.001
        %v1958 = vcombine.high %v1956, %v1956
        %v1960 = vadd.f32 %v1954, %v1956
        %v1961 = vadd.f32 %v1955, %v1958
        %v1964 = vcombine.low %v1960, %v1961
        %1966 = vst [vmem:[%s303] sm:$0xff] %v1964
        %s1967 = sand.u32 %s188, 1
        %s1968 = scalar_lea.sflag [#allocation5], %s1967
        %s1969 = sand.u32 %s188, 1
        %s1970 = smul.addr %s1969, 8
        %s1971 = scalar_lea.vmem [#allocation4], %s1970
        %s1972 = sand.u32 %s218, 1
        %s1973 = scalar_lea.sflag [#allocation7], %s1972
        %s1974 = sand.u32 %s218, 1
        %s1975 = smul.addr %s1974, 512
        %s1976 = scalar_lea.vmem [#allocation6], %s1975
        // Predicated region
        $region49: #{tpu_custom_call.1} parent=43 // pred_check
          %p1977 = pneg %p198
        $region50: #{tpu_custom_call.1} parent=43 // pred_check_branch
          %1979 = sbr.rel (%p1977) target = $region52
        $region51: #{tpu_custom_call.1} parent=43 // pred_region
          %s1980 = sadd.s32 %s32, %s33
          %s1981 = smul.u32 2, %s1980
          %s1983 = ssub.s32 128, 128
          %1984 = vsyncadd %s1968, %s1983
          %s1985 = smul.addr %s31, 2
          %s1986 = sadd.s32 %s1981, %s1985
          %s1987 = smul.addr %s1986, 64
          %s1988 = scalar_lea.hbm %s6, %s1987
          %s1990 = sshll.u32 %s1971, 4
          %s1991 = int_to_ptr.vmem [resolvable:$true] %s1990
          %1993 = dma.vmem_to_hbm [thread:$0]  %s1991, 128, %s1988, %s1968
        $region52: #{tpu_custom_call.1} parent=43 // pred_fallthru
          _
        // Predicated region
        $region53: #{tpu_custom_call.1} parent=43 // pred_check
          %p1994 = pneg %p228
        $region54: #{tpu_custom_call.1} parent=43 // pred_check_branch
          %1996 = sbr.rel (%p1994) target = $region56
        $region55: #{tpu_custom_call.1} parent=43 // pred_region
          %s1997 = sadd.s32 %s32, %s33
          %s1998 = smul.u32 32, %s1997
          %s2000 = ssub.s32 8192, 8192
          %2001 = vsyncadd %s1973, %s2000
          %s2002 = smul.addr %s1998, 2
          %s2003 = smul.addr %s31, 64
          %s2004 = sadd.s32 %s2002, %s2003
          %s2005 = smul.addr %s2004, 128
          %s2006 = scalar_lea.hbm %s7, %s2005
          %s2007 = sshll.u32 %s1976, 4
          %s2008 = int_to_ptr.vmem [resolvable:$true] %s2007
          %2013 = dma.vmem_to_hbm [thread:$0]  %s2008, 8192, %s2006, %s1973, 256, 256, 16
        $region56: #{tpu_custom_call.1} parent=43 // pred_fallthru
          _
      $region44: #{tpu_custom_call.1} parent=5 // pred_fallthru
        _
      %p2014 = scmp.le.s32.totalorder 2, %s21
      // Predicated region
      $region57: #{tpu_custom_call.1} parent=5 // pred_check
        %p2015 = pneg %p2014
      $region58: #{tpu_custom_call.1} parent=5 // pred_check_branch
        %2017 = sbr.rel (%p2015) target = $region60
      $region59: #{tpu_custom_call.1} parent=5 // pred_region
        %s2018 = ssub.s32 %s21, 2
        // Predicated region
        $region61: #{tpu_custom_call.1} parent=59 // pred_check
          %p2019 = pneg %p204
        $region62: #{tpu_custom_call.1} parent=59 // pred_check_branch
          %2021 = sbr.rel (%p2019) target = $region64
        $region63: #{tpu_custom_call.1} parent=59 // pred_region
          %s2022 = sand.u32 %s189, 1
          %s2023 = scalar_lea.sflag [#allocation5], %s2022
          %s2024 = sand.u32 %s189, 1
          %s2025 = smul.addr %s2024, 8
          %s2026 = scalar_lea.vmem [#allocation4], %s2025
          %2027 = dma.done %s2023, 128
        $region64: #{tpu_custom_call.1} parent=59 // pred_fallthru
          _
        // Predicated region
        $region65: #{tpu_custom_call.1} parent=59 // pred_check
          %p2028 = pneg %p234
        $region66: #{tpu_custom_call.1} parent=59 // pred_check_branch
          %2030 = sbr.rel (%p2028) target = $region68
        $region67: #{tpu_custom_call.1} parent=59 // pred_region
          %s2031 = sand.u32 %s219, 1
          %s2032 = scalar_lea.sflag [#allocation7], %s2031
          %s2033 = sand.u32 %s219, 1
          %s2034 = smul.addr %s2033, 512
          %s2035 = scalar_lea.vmem [#allocation6], %s2034
          %2036 = dma.done %s2032, 8192
        $region68: #{tpu_custom_call.1} parent=59 // pred_fallthru
          _
      $region60: #{tpu_custom_call.1} parent=5 // pred_fallthru
        _
    $region6: #{tpu_custom_call.1} parent=1 // loop_footer
      %s25 = sadd.s32 1, %s21
    $region7: #{tpu_custom_call.1} parent=1 // loop_footer_branch
      %20 = sbr.rel target = $region3
    $region8: #{tpu_custom_call.1} parent=1 // loop_exit
      _
    %2037 = vsyncpa [#allocation5], 1
    %s2038 = scalar_lea.sflag [#allocation5], 1
    %2039 = vsyncpa %s2038, 1
    %2040 = vsyncpa [#allocation7], 1
    %s2041 = scalar_lea.sflag [#allocation7], 1
    %2042 = vsyncpa %s2041, 1

</llo_original>
